<compile_context>
chip_gen: v6e
topology: v6e:2x2x1
jax: 0.10.0
libtpu: 0.0.40
codegen_flags: <defaults>
</compile_context>

<pallas_src>
import math

import jax
import jax.numpy as jnp
from jax import lax
from jax.experimental import pallas as pl
from jax.experimental.pallas import tpu as pltpu


def _layer_norm(x, g, b, eps=1e-5):
    mean = jnp.mean(x, axis=-1, keepdims=True)
    var = jnp.mean((x - mean) ** 2, axis=-1, keepdims=True)
    return (x - mean) * lax.rsqrt(var + eps) * g + b


def _gelu_tanh(x):
    # GELU with tanh approximation (matches nn.GELU(approximate='tanh'))
    c = math.sqrt(2.0 / math.pi)
    return 0.5 * x * (1.0 + jnp.tanh(c * (x + 0.044715 * x * x * x)))


def block_kernel(x_ref,
                 ln1_g_ref, ln1_b_ref,
                 wqkv_ref, bqkv_ref,
                 wo_ref, bo_ref,
                 ln2_g_ref, ln2_b_ref,
                 wfc_ref, bfc_ref,
                 wproj_ref, bproj_ref,
                 out_ref,
                 q_scr, k_scr, v_scr):
    qi = pl.program_id(1)
    T, D = x_ref.shape           # full sequence for this batch element
    TQ = out_ref.shape[0]        # query-tile rows
    w_dtype = wqkv_ref.dtype     # matmul operand dtype (f32 or bf16)

    # ---- once per batch element: LN1 + fused QKV over the full sequence ----
    @pl.when(qi == 0)
    def _():
        xf = x_ref[...].astype(jnp.float32)
        h = _layer_norm(xf,
                        ln1_g_ref[...].astype(jnp.float32),
                        ln1_b_ref[...].astype(jnp.float32))
        qkv = jnp.dot(h.astype(w_dtype), wqkv_ref[...],
                      preferred_element_type=jnp.float32)
        qkv = qkv + bqkv_ref[...].astype(jnp.float32)
        # Q columns already carry the 1/sqrt(D) scale (folded in the wrapper).
        q_scr[...] = qkv[:, 0:D].astype(w_dtype)
        k_scr[...] = qkv[:, D:2 * D].astype(w_dtype)
        v_scr[...] = qkv[:, 2 * D:3 * D].astype(w_dtype)

    # ---- per query tile: attention + residual, LN2 + MLP + residual ----
    r0 = pl.multiple_of(qi * TQ, TQ)
    x_t = x_ref[pl.ds(r0, TQ), :].astype(jnp.float32)        # (TQ, D)

    q_t = q_scr[pl.ds(r0, TQ), :]                             # (TQ, D)
    s = jnp.dot(q_t, k_scr[...].T, preferred_element_type=jnp.float32)

    # Causal mask generated in-kernel (no HBM mask stream).
    row = lax.broadcasted_iota(jnp.int32, (TQ, T), 0) + r0
    col = lax.broadcasted_iota(jnp.int32, (TQ, T), 1)
    s = jnp.where(row >= col, s, -1e30)

    s = s - jnp.max(s, axis=-1, keepdims=True)
    p = jnp.exp(s)
    l = jnp.sum(p, axis=-1, keepdims=True)
    y = jnp.dot(p.astype(w_dtype), v_scr[...],
                preferred_element_type=jnp.float32)
    y = y * pl.reciprocal(l, approx=True)                     # normalize after p@v

    attn = jnp.dot(y.astype(w_dtype), wo_ref[...],
                   preferred_element_type=jnp.float32)
    attn = attn + bo_ref[...].astype(jnp.float32)
    x_t = x_t + attn

    h2 = _layer_norm(x_t,
                     ln2_g_ref[...].astype(jnp.float32),
                     ln2_b_ref[...].astype(jnp.float32))
    fc = jnp.dot(h2.astype(w_dtype), wfc_ref[...],
                 preferred_element_type=jnp.float32)
    fc = _gelu_tanh(fc + bfc_ref[...].astype(jnp.float32))
    proj = jnp.dot(fc.astype(w_dtype), wproj_ref[...],
                   preferred_element_type=jnp.float32)
    proj = proj + bproj_ref[...].astype(jnp.float32)

    out_ref[...] = (x_t + proj).astype(out_ref.dtype)


def gpt2_block(x, params, *, param_dtype=jnp.float32, tq=128):
    B, T, D = x.shape
    H = params["wfc"].shape[1]                    # 4 * n_mlp

    TQ = T if T <= tq else tq
    assert T % TQ == 0, "sequence length must be divisible by the query tile"
    NQ = T // TQ

    # Fuse QKV into one (D, 3D) weight / (1, 3D) bias; fold 1/sqrt(D) into Q.
    scale = 1.0 / math.sqrt(D)
    wqkv = jnp.concatenate(
        [params["wq"] * scale, params["wk"], params["wv"]], axis=1
    ).astype(param_dtype)
    bqkv = jnp.concatenate(
        [params["bq"] * scale, params["bk"], params["bv"]], axis=1
    ).astype(param_dtype)
    wo = params["wo"].astype(param_dtype)
    bo = params["bo"].astype(param_dtype)
    wfc = params["wfc"].astype(param_dtype)
    bfc = params["bfc"].astype(param_dtype)
    wproj = params["wproj"].astype(param_dtype)
    bproj = params["bproj"].astype(param_dtype)
    # LayerNorm params stay f32 (VPU work).
    ln1_g = params["ln1_g"].astype(jnp.float32)
    ln1_b = params["ln1_b"].astype(jnp.float32)
    ln2_g = params["ln2_g"].astype(jnp.float32)
    ln2_b = params["ln2_b"].astype(jnp.float32)

    def const_spec(shape):
        n = len(shape)
        return pl.BlockSpec(shape, lambda b, q, n=n: (0,) * n)

    in_specs = [
        pl.BlockSpec((None, T, D), lambda b, q: (b, 0, 0)),   # x (full seq, resident per b)
        const_spec((1, D)), const_spec((1, D)),               # ln1 gamma, beta
        const_spec((D, 3 * D)), const_spec((1, 3 * D)),       # fused wqkv, bqkv
        const_spec((D, D)), const_spec((1, D)),               # wo, bo
        const_spec((1, D)), const_spec((1, D)),               # ln2 gamma, beta
        const_spec((D, H)), const_spec((1, H)),               # wfc, bfc
        const_spec((H, D)), const_spec((1, D)),               # wproj, bproj
    ]
    out_spec = pl.BlockSpec((None, TQ, D), lambda b, q: (b, q, 0))

    return pl.pallas_call(
        block_kernel,
        out_shape=jax.ShapeDtypeStruct((B, T, D), x.dtype),
        grid=(B, NQ),
        in_specs=in_specs,
        out_specs=out_spec,
        scratch_shapes=[
            pltpu.VMEM((T, D), param_dtype),   # Q (pre-scaled)
            pltpu.VMEM((T, D), param_dtype),   # K
            pltpu.VMEM((T, D), param_dtype),   # V
        ],
        compiler_params=pltpu.CompilerParams(
            # K/V scratch is carried across query tiles -> q axis "arbitrary".
            dimension_semantics=("parallel", "arbitrary"),
            vmem_limit_bytes=48 * 1024 * 1024,
        ),
    )(x,
      ln1_g, ln1_b,
      wqkv, bqkv,
      wo, bo,
      ln2_g, ln2_b,
      wfc, bfc, wproj, bproj)


def gpt2_block_ref(x, params):
    """Pure-JAX f32 reference (same math) for correctness checking."""
    x = x.astype(jnp.float32)
    B, T, D = x.shape

    def ln(v, g, b):
        m = jnp.mean(v, -1, keepdims=True)
        var = jnp.mean((v - m) ** 2, -1, keepdims=True)
        return (v - m) * lax.rsqrt(var + 1e-5) * g + b

    h = ln(x, params["ln1_g"], params["ln1_b"])
    q = h @ params["wq"] + params["bq"]
    k = h @ params["wk"] + params["bk"]
    v = h @ params["wv"] + params["bv"]
    s = jnp.einsum("btd,bsd->bts", q, k) / jnp.sqrt(jnp.float32(D))
    mask = jnp.tril(jnp.ones((T, T), bool))
    s = jnp.where(mask, s, -jnp.inf)
    p = jax.nn.softmax(s, axis=-1)
    y = jnp.einsum("bts,bsd->btd", p, v)
    x = x + (y @ params["wo"] + params["bo"])

    h2 = ln(x, params["ln2_g"], params["ln2_b"])
    c = math.sqrt(2.0 / math.pi)
    fc = h2 @ params["wfc"] + params["bfc"]
    fc = 0.5 * fc * (1.0 + jnp.tanh(c * (fc + 0.044715 * fc ** 3)))
    x = x + (fc @ params["wproj"] + params["bproj"])
    return x


if __name__ == "__main__":
    # small shapes consistent with the module: n_embd=32, n_mlp=32; T=16 with
    # an 8-row query tile so the (batch, q-tile) grid path is exercised.
    B, T, D, n_mlp = 2, 16, 32, 32
    H = 4 * n_mlp

    key = jax.random.PRNGKey(0)
    ks = jax.random.split(key, 13)
    s = 0.02
    params = dict(
        ln1_g=jnp.ones((1, D), jnp.float32),
        ln1_b=jnp.zeros((1, D), jnp.float32),
        wq=jax.random.normal(ks[0], (D, D), jnp.float32) * s,
        bq=jax.random.normal(ks[1], (1, D), jnp.float32) * s,
        wk=jax.random.normal(ks[2], (D, D), jnp.float32) * s,
        bk=jax.random.normal(ks[3], (1, D), jnp.float32) * s,
        wv=jax.random.normal(ks[4], (D, D), jnp.float32) * s,
        bv=jax.random.normal(ks[5], (1, D), jnp.float32) * s,
        wo=jax.random.normal(ks[6], (D, D), jnp.float32) * s,
        bo=jax.random.normal(ks[7], (1, D), jnp.float32) * s,
        ln2_g=jnp.ones((1, D), jnp.float32),
        ln2_b=jnp.zeros((1, D), jnp.float32),
        wfc=jax.random.normal(ks[8], (D, H), jnp.float32) * s,
        bfc=jax.random.normal(ks[9], (1, H), jnp.float32) * s,
        wproj=jax.random.normal(ks[10], (H, D), jnp.float32) * s,
        bproj=jax.random.normal(ks[11], (1, D), jnp.float32) * s,
    )
    x = jax.random.normal(ks[12], (B, T, D), jnp.float32)

    ref = gpt2_block_ref(x, params)

    # f32 weights: tight check against the f32 reference.
    out = gpt2_block(x, params, param_dtype=jnp.float32, tq=8)
    out = jax.block_until_ready(out)
    assert out.shape == (B, T, D)
    assert jnp.allclose(out, ref, atol=5e-3, rtol=5e-3), "f32 mismatch vs reference"

    # bf16 weights (f32 accumulation): looser check against the f32 reference.
    out_bf16 = gpt2_block(x, params, param_dtype=jnp.bfloat16, tq=8)
    out_bf16 = jax.block_until_ready(out_bf16)
    assert jnp.allclose(out_bf16.astype(jnp.float32), ref,
                        atol=3e-2, rtol=3e-2), "bf16 mismatch vs reference"

    print("KERNEL_OK")
</pallas_src>

<mosaic_0001>
module attributes {stable_mosaic.version = 11 : i64} {
  func.func @block_kernel(%arg0: i32, %arg1: i32, %arg2: memref<1x16x32xf32, #tpu.memory_space<vmem>>, %arg3: memref<1x32xf32, #tpu.memory_space<vmem>>, %arg4: memref<1x32xf32, #tpu.memory_space<vmem>>, %arg5: memref<32x96xf32, #tpu.memory_space<vmem>>, %arg6: memref<1x96xf32, #tpu.memory_space<vmem>>, %arg7: memref<32x32xf32, #tpu.memory_space<vmem>>, %arg8: memref<1x32xf32, #tpu.memory_space<vmem>>, %arg9: memref<1x32xf32, #tpu.memory_space<vmem>>, %arg10: memref<1x32xf32, #tpu.memory_space<vmem>>, %arg11: memref<32x128xf32, #tpu.memory_space<vmem>>, %arg12: memref<1x128xf32, #tpu.memory_space<vmem>>, %arg13: memref<128x32xf32, #tpu.memory_space<vmem>>, %arg14: memref<1x32xf32, #tpu.memory_space<vmem>>, %arg15: memref<1x8x32xf32, #tpu.memory_space<vmem>>, %arg16: memref<16x32xf32, #tpu.memory_space<vmem>>, %arg17: memref<16x32xf32, #tpu.memory_space<vmem>>, %arg18: memref<16x32xf32, #tpu.memory_space<vmem>>) attributes {dimension_semantics = [#tpu.dimension_semantics<parallel>, #tpu.dimension_semantics<arbitrary>], iteration_bounds = array<i64: 2, 2>, scalar_prefetch = 0 : i64, scratch_operands = 3 : i64, tpu.core_type = #tpu.core_type<tc>, window_params = [{transform_indices = @transform_0, window_bounds = array<i64: 1, 16, 32>}, {pipeline_mode = #tpu.pipeline_mode<synchronous>, transform_indices = @transform_1, window_bounds = array<i64: 1, 32>}, {pipeline_mode = #tpu.pipeline_mode<synchronous>, transform_indices = @transform_2, window_bounds = array<i64: 1, 32>}, {pipeline_mode = #tpu.pipeline_mode<synchronous>, transform_indices = @transform_3, window_bounds = array<i64: 32, 96>}, {pipeline_mode = #tpu.pipeline_mode<synchronous>, transform_indices = @transform_4, window_bounds = array<i64: 1, 96>}, {pipeline_mode = #tpu.pipeline_mode<synchronous>, transform_indices = @transform_5, window_bounds = array<i64: 32, 32>}, {pipeline_mode = #tpu.pipeline_mode<synchronous>, transform_indices = @transform_6, window_bounds = array<i64: 1, 32>}, {pipeline_mode = #tpu.pipeline_mode<synchronous>, transform_indices = @transform_7, window_bounds = array<i64: 1, 32>}, {pipeline_mode = #tpu.pipeline_mode<synchronous>, transform_indices = @transform_8, window_bounds = array<i64: 1, 32>}, {pipeline_mode = #tpu.pipeline_mode<synchronous>, transform_indices = @transform_9, window_bounds = array<i64: 32, 128>}, {pipeline_mode = #tpu.pipeline_mode<synchronous>, transform_indices = @transform_10, window_bounds = array<i64: 1, 128>}, {pipeline_mode = #tpu.pipeline_mode<synchronous>, transform_indices = @transform_11, window_bounds = array<i64: 128, 32>}, {pipeline_mode = #tpu.pipeline_mode<synchronous>, transform_indices = @transform_12, window_bounds = array<i64: 1, 32>}, {transform_indices = @transform_13, window_bounds = array<i64: 1, 8, 32>}]} {
    %c0_i32 = arith.constant 0 : i32
    %0 = arith.cmpi eq, %arg1, %c0_i32 : i32
    %1 = arith.extui %0 : i1 to i32
    %c0_i32_0 = arith.constant 0 : i32
    %2 = arith.cmpi ne, %1, %c0_i32_0 : i32
    scf.if %2 {
      %c0_42 = arith.constant 0 : index
      %c0_43 = arith.constant 0 : index
      %c0_44 = arith.constant 0 : index
      %89 = vector.load %arg2[%c0_42, %c0_43, %c0_44] : memref<1x16x32xf32, #tpu.memory_space<vmem>>, vector<1x16x32xf32>
      %90 = vector.shape_cast %89 : vector<1x16x32xf32> to vector<16x32xf32>
      %c0_45 = arith.constant 0 : index
      %c0_46 = arith.constant 0 : index
      %91 = vector.load %arg3[%c0_45, %c0_46] : memref<1x32xf32, #tpu.memory_space<vmem>>, vector<1x32xf32>
      %c0_47 = arith.constant 0 : index
      %c0_48 = arith.constant 0 : index
      %92 = vector.load %arg4[%c0_47, %c0_48] : memref<1x32xf32, #tpu.memory_space<vmem>>, vector<1x32xf32>
      %cst_49 = arith.constant dense<0.000000e+00> : vector<16xf32>
      %93 = vector.multi_reduction <add>, %90, %cst_49 [1] : vector<16x32xf32> to vector<16xf32>
      %94 = vector.shape_cast %93 : vector<16xf32> to vector<16x1xf32>
      %cst_50 = arith.constant 3.200000e+01 : f32
      %95 = vector.broadcast %cst_50 : f32 to vector<16x1xf32>
      %96 = arith.divf %94, %95 : vector<16x1xf32>
      %97 = vector.broadcast %96 : vector<16x1xf32> to vector<16x32xf32>
      %98 = arith.subf %90, %97 : vector<16x32xf32>
      %99 = arith.mulf %98, %98 : vector<16x32xf32>
      %cst_51 = arith.constant dense<0.000000e+00> : vector<16xf32>
      %100 = vector.multi_reduction <add>, %99, %cst_51 [1] : vector<16x32xf32> to vector<16xf32>
      %101 = vector.shape_cast %100 : vector<16xf32> to vector<16x1xf32>
      %cst_52 = arith.constant 3.200000e+01 : f32
      %102 = vector.broadcast %cst_52 : f32 to vector<16x1xf32>
      %103 = arith.divf %101, %102 : vector<16x1xf32>
      %104 = vector.broadcast %96 : vector<16x1xf32> to vector<16x32xf32>
      %105 = arith.subf %90, %104 : vector<16x32xf32>
      %cst_53 = arith.constant 9.99999974E-6 : f32
      %106 = vector.broadcast %cst_53 : f32 to vector<16x1xf32>
      %107 = arith.addf %103, %106 : vector<16x1xf32>
      %108 = math.rsqrt %107 : vector<16x1xf32>
      %109 = vector.broadcast %108 : vector<16x1xf32> to vector<16x32xf32>
      %110 = arith.mulf %105, %109 : vector<16x32xf32>
      %111 = vector.broadcast %91 : vector<1x32xf32> to vector<16x32xf32>
      %112 = arith.mulf %110, %111 : vector<16x32xf32>
      %113 = vector.broadcast %92 : vector<1x32xf32> to vector<16x32xf32>
      %114 = arith.addf %112, %113 : vector<16x32xf32>
      %c0_54 = arith.constant 0 : index
      %c0_55 = arith.constant 0 : index
      %115 = vector.load %arg5[%c0_54, %c0_55] : memref<32x96xf32, #tpu.memory_space<vmem>>, vector<32x96xf32>
      %cst_56 = arith.constant dense<0.000000e+00> : vector<16x96xf32>
      %116 = tpu.matmul %114, %115, %cst_56 {dimension_numbers = #tpu.dot_dimension_numbers<[1], [0], [0], [1], [0, 0, 1, 1], [], []>} : vector<16x32xf32>, vector<32x96xf32>, vector<16x96xf32> -> vector<16x96xf32>
      %c0_57 = arith.constant 0 : index
      %c0_58 = arith.constant 0 : index
      %117 = vector.load %arg6[%c0_57, %c0_58] : memref<1x96xf32, #tpu.memory_space<vmem>>, vector<1x96xf32>
      %118 = vector.broadcast %117 : vector<1x96xf32> to vector<16x96xf32>
      %119 = arith.addf %116, %118 : vector<16x96xf32>
      %120 = vector.extract_strided_slice %119 {offsets = [0, 0], sizes = [16, 32], strides = [1, 1]} : vector<16x96xf32> to vector<16x32xf32>
      %c0_59 = arith.constant 0 : index
      %c0_60 = arith.constant 0 : index
      %121 = vector.load %arg16[%c0_59, %c0_60] : memref<16x32xf32, #tpu.memory_space<vmem>>, vector<16x32xf32>
      tpu.vector_store %arg16[%c0_59, %c0_60], %120 {strides = array<i32>} : memref<16x32xf32, #tpu.memory_space<vmem>>, vector<16x32xf32>,
      %122 = vector.extract_strided_slice %119 {offsets = [0, 32], sizes = [16, 32], strides = [1, 1]} : vector<16x96xf32> to vector<16x32xf32>
      %c0_61 = arith.constant 0 : index
      %c0_62 = arith.constant 0 : index
      %123 = vector.load %arg17[%c0_61, %c0_62] : memref<16x32xf32, #tpu.memory_space<vmem>>, vector<16x32xf32>
      tpu.vector_store %arg17[%c0_61, %c0_62], %122 {strides = array<i32>} : memref<16x32xf32, #tpu.memory_space<vmem>>, vector<16x32xf32>,
      %124 = vector.extract_strided_slice %119 {offsets = [0, 64], sizes = [16, 32], strides = [1, 1]} : vector<16x96xf32> to vector<16x32xf32>
      %c0_63 = arith.constant 0 : index
      %c0_64 = arith.constant 0 : index
      %125 = vector.load %arg18[%c0_63, %c0_64] : memref<16x32xf32, #tpu.memory_space<vmem>>, vector<16x32xf32>
      tpu.vector_store %arg18[%c0_63, %c0_64], %124 {strides = array<i32>} : memref<16x32xf32, #tpu.memory_space<vmem>>, vector<16x32xf32>,
    } else {
    }
    %c8_i32 = arith.constant 8 : i32
    %3 = arith.muli %arg1, %c8_i32 : i32
    %4 = tpu.assume_multiple %3, 8 : i32
    %c0 = arith.constant 0 : index
    %5 = arith.index_cast %4 : i32 to index
    %c0_1 = arith.constant 0 : index
    %6 = vector.load %arg2[%c0, %5, %c0_1] : memref<1x16x32xf32, #tpu.memory_space<vmem>>, vector<1x8x32xf32>
    %7 = vector.shape_cast %6 : vector<1x8x32xf32> to vector<8x32xf32>
    %8 = arith.index_cast %4 : i32 to index
    %c0_2 = arith.constant 0 : index
    %9 = vector.load %arg16[%8, %c0_2] : memref<16x32xf32, #tpu.memory_space<vmem>>, vector<8x32xf32>
    %c0_3 = arith.constant 0 : index
    %c0_4 = arith.constant 0 : index
    %10 = vector.load %arg17[%c0_3, %c0_4] : memref<16x32xf32, #tpu.memory_space<vmem>>, vector<16x32xf32>
    %11 = tpu.transpose %10, [1, 0] : vector<16x32xf32> -> vector<32x16xf32>
    %cst = arith.constant dense<0.000000e+00> : vector<8x16xf32>
    %12 = tpu.matmul %9, %11, %cst {dimension_numbers = #tpu.dot_dimension_numbers<[1], [0], [0], [1], [0, 0, 1, 1], [], []>} : vector<8x32xf32>, vector<32x16xf32>, vector<8x16xf32> -> vector<8x16xf32>
    %13 = tpu.iota {dimensions = array<i32: 0>} : vector<8x16xi32>
    %14 = vector.broadcast %4 : i32 to vector<8x16xi32>
    %15 = arith.addi %13, %14 : vector<8x16xi32>
    %16 = tpu.iota {dimensions = array<i32: 1>} : vector<8x16xi32>
    %17 = arith.cmpi sge, %15, %16 : vector<8x16xi32>
    %cst_5 = arith.constant -1.000000e+30 : f32
    %18 = vector.broadcast %cst_5 : f32 to vector<8x16xf32>
    %19 = arith.select %17, %12, %18 : vector<8x16xi1>, vector<8x16xf32>
    %cst_6 = arith.constant dense<0xFF800000> : vector<8xf32>
    %20 = vector.multi_reduction <maximumf>, %19, %cst_6 [1] : vector<8x16xf32> to vector<8xf32>
    %21 = vector.shape_cast %20 : vector<8xf32> to vector<8x1xf32>
    %22 = vector.broadcast %21 : vector<8x1xf32> to vector<8x16xf32>
    %23 = arith.subf %19, %22 : vector<8x16xf32>
    %24 = math.exp %23 : vector<8x16xf32>
    %cst_7 = arith.constant dense<0.000000e+00> : vector<8xf32>
    %25 = vector.multi_reduction <add>, %24, %cst_7 [1] : vector<8x16xf32> to vector<8xf32>
    %26 = vector.shape_cast %25 : vector<8xf32> to vector<8x1xf32>
    %c0_8 = arith.constant 0 : index
    %c0_9 = arith.constant 0 : index
    %27 = vector.load %arg18[%c0_8, %c0_9] : memref<16x32xf32, #tpu.memory_space<vmem>>, vector<16x32xf32>
    %cst_10 = arith.constant dense<0.000000e+00> : vector<8x32xf32>
    %28 = tpu.matmul %24, %27, %cst_10 {dimension_numbers = #tpu.dot_dimension_numbers<[1], [0], [0], [1], [0, 0, 1, 1], [], []>} : vector<8x16xf32>, vector<16x32xf32>, vector<8x32xf32> -> vector<8x32xf32>
    %29 = tpu.reciprocal %26 {approx = true} : vector<8x1xf32> -> vector<8x1xf32>
    %30 = vector.broadcast %29 : vector<8x1xf32> to vector<8x32xf32>
    %31 = arith.mulf %28, %30 : vector<8x32xf32>
    %c0_11 = arith.constant 0 : index
    %c0_12 = arith.constant 0 : index
    %32 = vector.load %arg7[%c0_11, %c0_12] : memref<32x32xf32, #tpu.memory_space<vmem>>, vector<32x32xf32>
    %cst_13 = arith.constant dense<0.000000e+00> : vector<8x32xf32>
    %33 = tpu.matmul %31, %32, %cst_13 {dimension_numbers = #tpu.dot_dimension_numbers<[1], [0], [0], [1], [0, 0, 1, 1], [], []>} : vector<8x32xf32>, vector<32x32xf32>, vector<8x32xf32> -> vector<8x32xf32>
    %c0_14 = arith.constant 0 : index
    %c0_15 = arith.constant 0 : index
    %34 = vector.load %arg8[%c0_14, %c0_15] : memref<1x32xf32, #tpu.memory_space<vmem>>, vector<1x32xf32>
    %35 = vector.broadcast %34 : vector<1x32xf32> to vector<8x32xf32>
    %36 = arith.addf %33, %35 : vector<8x32xf32>
    %37 = arith.addf %7, %36 : vector<8x32xf32>
    %c0_16 = arith.constant 0 : index
    %c0_17 = arith.constant 0 : index
    %38 = vector.load %arg9[%c0_16, %c0_17] : memref<1x32xf32, #tpu.memory_space<vmem>>, vector<1x32xf32>
    %c0_18 = arith.constant 0 : index
    %c0_19 = arith.constant 0 : index
    %39 = vector.load %arg10[%c0_18, %c0_19] : memref<1x32xf32, #tpu.memory_space<vmem>>, vector<1x32xf32>
    %cst_20 = arith.constant dense<0.000000e+00> : vector<8xf32>
    %40 = vector.multi_reduction <add>, %37, %cst_20 [1] : vector<8x32xf32> to vector<8xf32>
    %41 = vector.shape_cast %40 : vector<8xf32> to vector<8x1xf32>
    %cst_21 = arith.constant 3.200000e+01 : f32
    %42 = vector.broadcast %cst_21 : f32 to vector<8x1xf32>
    %43 = arith.divf %41, %42 : vector<8x1xf32>
    %44 = vector.broadcast %43 : vector<8x1xf32> to vector<8x32xf32>
    %45 = arith.subf %37, %44 : vector<8x32xf32>
    %46 = arith.mulf %45, %45 : vector<8x32xf32>
    %cst_22 = arith.constant dense<0.000000e+00> : vector<8xf32>
    %47 = vector.multi_reduction <add>, %46, %cst_22 [1] : vector<8x32xf32> to vector<8xf32>
    %48 = vector.shape_cast %47 : vector<8xf32> to vector<8x1xf32>
    %cst_23 = arith.constant 3.200000e+01 : f32
    %49 = vector.broadcast %cst_23 : f32 to vector<8x1xf32>
    %50 = arith.divf %48, %49 : vector<8x1xf32>
    %51 = vector.broadcast %43 : vector<8x1xf32> to vector<8x32xf32>
    %52 = arith.subf %37, %51 : vector<8x32xf32>
    %cst_24 = arith.constant 9.99999974E-6 : f32
    %53 = vector.broadcast %cst_24 : f32 to vector<8x1xf32>
    %54 = arith.addf %50, %53 : vector<8x1xf32>
    %55 = math.rsqrt %54 : vector<8x1xf32>
    %56 = vector.broadcast %55 : vector<8x1xf32> to vector<8x32xf32>
    %57 = arith.mulf %52, %56 : vector<8x32xf32>
    %58 = vector.broadcast %38 : vector<1x32xf32> to vector<8x32xf32>
    %59 = arith.mulf %57, %58 : vector<8x32xf32>
    %60 = vector.broadcast %39 : vector<1x32xf32> to vector<8x32xf32>
    %61 = arith.addf %59, %60 : vector<8x32xf32>
    %c0_25 = arith.constant 0 : index
    %c0_26 = arith.constant 0 : index
    %62 = vector.load %arg11[%c0_25, %c0_26] : memref<32x128xf32, #tpu.memory_space<vmem>>, vector<32x128xf32>
    %cst_27 = arith.constant dense<0.000000e+00> : vector<8x128xf32>
    %63 = tpu.matmul %61, %62, %cst_27 {dimension_numbers = #tpu.dot_dimension_numbers<[1], [0], [0], [1], [0, 0, 1, 1], [], []>} : vector<8x32xf32>, vector<32x128xf32>, vector<8x128xf32> -> vector<8x128xf32>
    %c0_28 = arith.constant 0 : index
    %c0_29 = arith.constant 0 : index
    %64 = vector.load %arg12[%c0_28, %c0_29] : memref<1x128xf32, #tpu.memory_space<vmem>>, vector<1x128xf32>
    %65 = vector.broadcast %64 : vector<1x128xf32> to vector<8x128xf32>
    %66 = arith.addf %63, %65 : vector<8x128xf32>
    %cst_30 = arith.constant 5.000000e-01 : f32
    %67 = vector.broadcast %cst_30 : f32 to vector<8x128xf32>
    %68 = arith.mulf %67, %66 : vector<8x128xf32>
    %cst_31 = arith.constant 4.471500e-02 : f32
    %69 = vector.broadcast %cst_31 : f32 to vector<8x128xf32>
    %70 = arith.mulf %69, %66 : vector<8x128xf32>
    %71 = arith.mulf %70, %66 : vector<8x128xf32>
    %72 = arith.mulf %71, %66 : vector<8x128xf32>
    %73 = arith.addf %66, %72 : vector<8x128xf32>
    %cst_32 = arith.constant 0.797884583 : f32
    %74 = vector.broadcast %cst_32 : f32 to vector<8x128xf32>
    %75 = arith.mulf %74, %73 : vector<8x128xf32>
    %76 = math.tanh %75 : vector<8x128xf32>
    %cst_33 = arith.constant 1.000000e+00 : f32
    %77 = vector.broadcast %cst_33 : f32 to vector<8x128xf32>
    %78 = arith.addf %77, %76 : vector<8x128xf32>
    %79 = arith.mulf %68, %78 : vector<8x128xf32>
    %c0_34 = arith.constant 0 : index
    %c0_35 = arith.constant 0 : index
    %80 = vector.load %arg13[%c0_34, %c0_35] : memref<128x32xf32, #tpu.memory_space<vmem>>, vector<128x32xf32>
    %cst_36 = arith.constant dense<0.000000e+00> : vector<8x32xf32>
    %81 = tpu.matmul %79, %80, %cst_36 {dimension_numbers = #tpu.dot_dimension_numbers<[1], [0], [0], [1], [0, 0, 1, 1], [], []>} : vector<8x128xf32>, vector<128x32xf32>, vector<8x32xf32> -> vector<8x32xf32>
    %c0_37 = arith.constant 0 : index
    %c0_38 = arith.constant 0 : index
    %82 = vector.load %arg14[%c0_37, %c0_38] : memref<1x32xf32, #tpu.memory_space<vmem>>, vector<1x32xf32>
    %83 = vector.broadcast %82 : vector<1x32xf32> to vector<8x32xf32>
    %84 = arith.addf %81, %83 : vector<8x32xf32>
    %85 = arith.addf %37, %84 : vector<8x32xf32>
    %c0_39 = arith.constant 0 : index
    %c0_40 = arith.constant 0 : index
    %c0_41 = arith.constant 0 : index
    %86 = vector.load %arg15[%c0_39, %c0_40, %c0_41] : memref<1x8x32xf32, #tpu.memory_space<vmem>>, vector<1x8x32xf32>
    %87 = vector.shape_cast %86 : vector<1x8x32xf32> to vector<8x32xf32>
    %88 = vector.shape_cast %85 : vector<8x32xf32> to vector<1x8x32xf32>
    tpu.vector_store %arg15[%c0_39, %c0_40, %c0_41], %88 {strides = array<i32>} : memref<1x8x32xf32, #tpu.memory_space<vmem>>, vector<1x8x32xf32>,
    return
  }
  func.func @transform_0(%arg0: i32, %arg1: i32) -> (i32, i32, i32) {
    %c0_i32 = arith.constant 0 : i32
    %c0_i32_0 = arith.constant 0 : i32
    %c0_i32_1 = arith.constant 0 : i32
    return %arg0, %c0_i32, %c0_i32_0 : i32, i32, i32
  }
  func.func @transform_1(%arg0: i32, %arg1: i32) -> (i32, i32) {
    %c0_i32 = arith.constant 0 : i32
    %c0_i32_0 = arith.constant 0 : i32
    %c0_i32_1 = arith.constant 0 : i32
    return %c0_i32, %c0_i32_0 : i32, i32
  }
  func.func @transform_2(%arg0: i32, %arg1: i32) -> (i32, i32) {
    %c0_i32 = arith.constant 0 : i32
    %c0_i32_0 = arith.constant 0 : i32
    %c0_i32_1 = arith.constant 0 : i32
    return %c0_i32, %c0_i32_0 : i32, i32
  }
  func.func @transform_3(%arg0: i32, %arg1: i32) -> (i32, i32) {
    %c0_i32 = arith.constant 0 : i32
    %c0_i32_0 = arith.constant 0 : i32
    %c0_i32_1 = arith.constant 0 : i32
    return %c0_i32, %c0_i32_0 : i32, i32
  }
  func.func @transform_4(%arg0: i32, %arg1: i32) -> (i32, i32) {
    %c0_i32 = arith.constant 0 : i32
    %c0_i32_0 = arith.constant 0 : i32
    %c0_i32_1 = arith.constant 0 : i32
    return %c0_i32, %c0_i32_0 : i32, i32
  }
  func.func @transform_5(%arg0: i32, %arg1: i32) -> (i32, i32) {
    %c0_i32 = arith.constant 0 : i32
    %c0_i32_0 = arith.constant 0 : i32
    %c0_i32_1 = arith.constant 0 : i32
    return %c0_i32, %c0_i32_0 : i32, i32
  }
  func.func @transform_6(%arg0: i32, %arg1: i32) -> (i32, i32) {
    %c0_i32 = arith.constant 0 : i32
    %c0_i32_0 = arith.constant 0 : i32
    %c0_i32_1 = arith.constant 0 : i32
    return %c0_i32, %c0_i32_0 : i32, i32
  }
  func.func @transform_7(%arg0: i32, %arg1: i32) -> (i32, i32) {
    %c0_i32 = arith.constant 0 : i32
    %c0_i32_0 = arith.constant 0 : i32
    %c0_i32_1 = arith.constant 0 : i32
    return %c0_i32, %c0_i32_0 : i32, i32
  }
  func.func @transform_8(%arg0: i32, %arg1: i32) -> (i32, i32) {
    %c0_i32 = arith.constant 0 : i32
    %c0_i32_0 = arith.constant 0 : i32
    %c0_i32_1 = arith.constant 0 : i32
    return %c0_i32, %c0_i32_0 : i32, i32
  }
  func.func @transform_9(%arg0: i32, %arg1: i32) -> (i32, i32) {
    %c0_i32 = arith.constant 0 : i32
    %c0_i32_0 = arith.constant 0 : i32
    %c0_i32_1 = arith.constant 0 : i32
    return %c0_i32, %c0_i32_0 : i32, i32
  }
  func.func @transform_10(%arg0: i32, %arg1: i32) -> (i32, i32) {
    %c0_i32 = arith.constant 0 : i32
    %c0_i32_0 = arith.constant 0 : i32
    %c0_i32_1 = arith.constant 0 : i32
    return %c0_i32, %c0_i32_0 : i32, i32
  }
  func.func @transform_11(%arg0: i32, %arg1: i32) -> (i32, i32) {
    %c0_i32 = arith.constant 0 : i32
    %c0_i32_0 = arith.constant 0 : i32
    %c0_i32_1 = arith.constant 0 : i32
    return %c0_i32, %c0_i32_0 : i32, i32
  }
  func.func @transform_12(%arg0: i32, %arg1: i32) -> (i32, i32) {
    %c0_i32 = arith.constant 0 : i32
    %c0_i32_0 = arith.constant 0 : i32
    %c0_i32_1 = arith.constant 0 : i32
    return %c0_i32, %c0_i32_0 : i32, i32
  }
  func.func @transform_13(%arg0: i32, %arg1: i32) -> (i32, i32, i32) {
    %c0_i32 = arith.constant 0 : i32
    %c0_i32_0 = arith.constant 0 : i32
    return %arg0, %arg1, %c0_i32 : i32, i32, i32
  }
}

</mosaic_0001>

<llo_original>
// kernel: tpu_custom_call.1
$region0: #{tpu_custom_call.1}
  #allocation0 [shape = 'u32[]', space=smem, size = 0x4, offset = 0x4, fixed_abs, tag = 'smem constant byte address 0x4 - core index']
  #allocation1 [shape = 'u32[144,128]{1,0:T(1,128)}', space=vmem, size = 0x12000, scoped, tag = 'internal scratch']
  #allocation2 [shape = 'f32[16,32]{1,0:T(8,128)}', space=vmem, size = 0x2000, scoped, tag = 'scratch operand']
  #allocation3 [shape = 'f32[16,32]{1,0:T(8,128)}', space=vmem, size = 0x2000, scoped, tag = 'scratch operand']
  #allocation4 [shape = 'f32[16,32]{1,0:T(8,128)}', space=vmem, size = 0x2000, scoped, tag = 'scratch operand']
  %s0 = inlined_call_operand.vmem [shape: f32[2,16,32], index: 0, kind: input, shape index: {}]
  %s1 = inlined_call_operand.vmem [shape: f32[1,32], index: 1, kind: input, shape index: {}]
  %s2 = inlined_call_operand.vmem [shape: f32[1,32], index: 2, kind: input, shape index: {}]
  %s3 = inlined_call_operand.vmem [shape: f32[32,96], index: 3, kind: input, shape index: {}]
  %s4 = inlined_call_operand.vmem [shape: f32[1,96], index: 4, kind: input, shape index: {}]
  %s5 = inlined_call_operand.vmem [shape: f32[32,32], index: 5, kind: input, shape index: {}]
  %s6 = inlined_call_operand.vmem [shape: f32[1,32], index: 6, kind: input, shape index: {}]
  %s7 = inlined_call_operand.vmem [shape: f32[1,32], index: 7, kind: input, shape index: {}]
  %s8 = inlined_call_operand.vmem [shape: f32[1,32], index: 8, kind: input, shape index: {}]
  %s9 = inlined_call_operand.vmem [shape: f32[32,128], index: 9, kind: input, shape index: {}]
  %s10 = inlined_call_operand.vmem [shape: f32[1,128], index: 10, kind: input, shape index: {}]
  %s11 = inlined_call_operand.vmem [shape: f32[128,32], index: 11, kind: input, shape index: {}]
  %s12 = inlined_call_operand.vmem [shape: f32[1,32], index: 12, kind: input, shape index: {}]
  %s13 = inlined_call_operand.hbm [shape: f32[2,16,32], index: 13, kind: output, shape index: {}]
  %s14 = sld [smem:[#allocation0]]
  $region89: #{tpu_custom_call.1} parent=0
    _
  %s16 = ssub.s32 1, %s14
  %s17 = scalar_select 0, %s16, %s14
  $region1: #{tpu_custom_call.1} parent=0
    #allocation5 [shape = 'u8[8192]{0}', space=vmem, size = 0x2000, scoped, tag = 'output window, operand 0']
    #allocation6 [shape = 's32[2]{0}', space=sflag, size = 0x8, scoped, tag = 'scoped memory for tpu_custom_call.1']
    %18 = vsyncpa [#allocation6], 0
    %s19 = scalar_lea.sflag [#allocation6], 1
    %20 = vsyncpa %s19, 0
    loop: start=0, step=1, limit=6
    $region2: #{tpu_custom_call.1} parent=1 // loop_pre_header
      _
    $region3: #{tpu_custom_call.1} parent=1 // loop_header
      %s22 = sphi 0, %s26
      %p23 = scmp.ge.s32.totalorder %s22, 6
      %s29 = sphi 0, %s41
      %s30 = sphi 0, %s37
      %s31 = sphi 0, %s29
      %s32 = sphi 0, %s30
      %s33 = sphi 0, %s31
      %s34 = sphi 0, %s32
      %s44 = sphi 0, %s46
      %s47 = sphi 0, %s44
      %s48 = sphi 0, %s47
      %s64 = sphi 0, %s48
      %s68 = sphi 0, %s68
      %s70 = sphi 0, %s68
      %s71 = sphi 0, %s70
      %s85 = sphi 0, %s71
      %s89 = sphi 0, %s89
      %s91 = sphi 0, %s89
      %s92 = sphi 0, %s91
      %s106 = sphi 0, %s92
      %s110 = sphi 0, %s110
      %s112 = sphi 0, %s110
      %s113 = sphi 0, %s112
      %s127 = sphi 0, %s113
      %s131 = sphi 0, %s131
      %s133 = sphi 0, %s131
      %s134 = sphi 0, %s133
      %s148 = sphi 0, %s134
      %s152 = sphi 0, %s152
      %s154 = sphi 0, %s152
      %s155 = sphi 0, %s154
      %s169 = sphi 0, %s155
      %s173 = sphi 0, %s173
      %s175 = sphi 0, %s173
      %s176 = sphi 0, %s175
      %s190 = sphi 0, %s176
      %s194 = sphi 0, %s194
      %s196 = sphi 0, %s194
      %s197 = sphi 0, %s196
      %s211 = sphi 0, %s197
      %s215 = sphi 0, %s215
      %s217 = sphi 0, %s215
      %s218 = sphi 0, %s217
      %s232 = sphi 0, %s218
      %s236 = sphi 0, %s236
      %s238 = sphi 0, %s236
      %s239 = sphi 0, %s238
      %s253 = sphi 0, %s239
      %s257 = sphi 0, %s257
      %s259 = sphi 0, %s257
      %s260 = sphi 0, %s259
      %s274 = sphi 0, %s260
      %s278 = sphi 0, %s278
      %s280 = sphi 0, %s278
      %s281 = sphi 0, %s280
      %s295 = sphi 0, %s281
      %s299 = sphi 0, %s299
      %s301 = sphi 0, %s299
      %s302 = sphi 0, %s301
      %s316 = sphi 0, %s302
      %s324 = sphi 0, %s326
      %s327 = sphi 0, %s324
      %s328 = sphi 0, %s327
      %s344 = sphi 0, %s328
    $region4: #{tpu_custom_call.1} parent=1 // loop_header_branch
      %25 = sbr.rel (%p23) target = $region8
    $region5: #{tpu_custom_call.1} parent=1 // loop_body
      %s27 = ssub.s32 %s22, 1
      %s28 = ssub.s32 %s22, 2
      %s35 = sadd.s32 1, %s30
      %p36 = scmp.ge.s32.totalorder %s35, 2
      %s37 = scalar_select %p36, 0, %s35
      %s38 = sadd.s32 1, %s29
      %s39 = scalar_select %p36, %s38, %s29
      %p40 = scmp.ge.s32.totalorder %s39, 2
      %s41 = scalar_select %p40, 0, %s39
      %s42 = ssub.s32 %s29, %s41
      %p43 = scmp.eq.s32.totalorder %s42, 0
      %s45 = sadd.s32 %s44, 1
      %s46 = scalar_select %p43, %s44, %s45
      %p49 = pneg %p43
      %p50 = scmp.eq.s32.totalorder %s22, 3
      %p51 = por %p49, %p50
      %p52 = scmp.ne.s32.totalorder %s44, %s47
      %p53 = scmp.eq.s32.totalorder %s22, 0
      %p54 = por %p52, %p53
      %p55 = scmp.ne.s32.totalorder %s44, %s47
      %p56 = scmp.eq.s32.totalorder %s27, 3
      %p57 = por %p55, %p56
      %p58 = scmp.ne.s32.totalorder %s47, %s48
      %p59 = scmp.eq.s32.totalorder %s27, 0
      %p60 = por %p58, %p59
      %p61 = scmp.ne.s32.totalorder %s47, %s48
      %p62 = scmp.eq.s32.totalorder %s28, 3
      %p63 = por %p61, %p62
      %p65 = scmp.ne.s32.totalorder %s48, %s64
      %p66 = scmp.eq.s32.totalorder %s28, 0
      %p67 = por %p65, %p66
      %s69 = sadd.s32 %s68, 1
      %p72 = scmp.eq.s32.totalorder %s22, 3
      %p73 = scmp.ne.s32.totalorder %s68, %s70
      %p74 = scmp.eq.s32.totalorder %s22, 0
      %p75 = por %p73, %p74
      %p76 = scmp.ne.s32.totalorder %s68, %s70
      %p77 = scmp.eq.s32.totalorder %s27, 3
      %p78 = por %p76, %p77
      %p79 = scmp.ne.s32.totalorder %s70, %s71
      %p80 = scmp.eq.s32.totalorder %s27, 0
      %p81 = por %p79, %p80
      %p82 = scmp.ne.s32.totalorder %s70, %s71
      %p83 = scmp.eq.s32.totalorder %s28, 3
      %p84 = por %p82, %p83
      %p86 = scmp.ne.s32.totalorder %s71, %s85
      %p87 = scmp.eq.s32.totalorder %s28, 0
      %p88 = por %p86, %p87
      %s90 = sadd.s32 %s89, 1
      %p93 = scmp.eq.s32.totalorder %s22, 3
      %p94 = scmp.ne.s32.totalorder %s89, %s91
      %p95 = scmp.eq.s32.totalorder %s22, 0
      %p96 = por %p94, %p95
      %p97 = scmp.ne.s32.totalorder %s89, %s91
      %p98 = scmp.eq.s32.totalorder %s27, 3
      %p99 = por %p97, %p98
      %p100 = scmp.ne.s32.totalorder %s91, %s92
      %p101 = scmp.eq.s32.totalorder %s27, 0
      %p102 = por %p100, %p101
      %p103 = scmp.ne.s32.totalorder %s91, %s92
      %p104 = scmp.eq.s32.totalorder %s28, 3
      %p105 = por %p103, %p104
      %p107 = scmp.ne.s32.totalorder %s92, %s106
      %p108 = scmp.eq.s32.totalorder %s28, 0
      %p109 = por %p107, %p108
      %s111 = sadd.s32 %s110, 1
      %p114 = scmp.eq.s32.totalorder %s22, 3
      %p115 = scmp.ne.s32.totalorder %s110, %s112
      %p116 = scmp.eq.s32.totalorder %s22, 0
      %p117 = por %p115, %p116
      %p118 = scmp.ne.s32.totalorder %s110, %s112
      %p119 = scmp.eq.s32.totalorder %s27, 3
      %p120 = por %p118, %p119
      %p121 = scmp.ne.s32.totalorder %s112, %s113
      %p122 = scmp.eq.s32.totalorder %s27, 0
      %p123 = por %p121, %p122
      %p124 = scmp.ne.s32.totalorder %s112, %s113
      %p125 = scmp.eq.s32.totalorder %s28, 3
      %p126 = por %p124, %p125
      %p128 = scmp.ne.s32.totalorder %s113, %s127
      %p129 = scmp.eq.s32.totalorder %s28, 0
      %p130 = por %p128, %p129
      %s132 = sadd.s32 %s131, 1
      %p135 = scmp.eq.s32.totalorder %s22, 3
      %p136 = scmp.ne.s32.totalorder %s131, %s133
      %p137 = scmp.eq.s32.totalorder %s22, 0
      %p138 = por %p136, %p137
      %p139 = scmp.ne.s32.totalorder %s131, %s133
      %p140 = scmp.eq.s32.totalorder %s27, 3
      %p141 = por %p139, %p140
      %p142 = scmp.ne.s32.totalorder %s133, %s134
      %p143 = scmp.eq.s32.totalorder %s27, 0
      %p144 = por %p142, %p143
      %p145 = scmp.ne.s32.totalorder %s133, %s134
      %p146 = scmp.eq.s32.totalorder %s28, 3
      %p147 = por %p145, %p146
      %p149 = scmp.ne.s32.totalorder %s134, %s148
      %p150 = scmp.eq.s32.totalorder %s28, 0
      %p151 = por %p149, %p150
      %s153 = sadd.s32 %s152, 1
      %p156 = scmp.eq.s32.totalorder %s22, 3
      %p157 = scmp.ne.s32.totalorder %s152, %s154
      %p158 = scmp.eq.s32.totalorder %s22, 0
      %p159 = por %p157, %p158
      %p160 = scmp.ne.s32.totalorder %s152, %s154
      %p161 = scmp.eq.s32.totalorder %s27, 3
      %p162 = por %p160, %p161
      %p163 = scmp.ne.s32.totalorder %s154, %s155
      %p164 = scmp.eq.s32.totalorder %s27, 0
      %p165 = por %p163, %p164
      %p166 = scmp.ne.s32.totalorder %s154, %s155
      %p167 = scmp.eq.s32.totalorder %s28, 3
      %p168 = por %p166, %p167
      %p170 = scmp.ne.s32.totalorder %s155, %s169
      %p171 = scmp.eq.s32.totalorder %s28, 0
      %p172 = por %p170, %p171
      %s174 = sadd.s32 %s173, 1
      %p177 = scmp.eq.s32.totalorder %s22, 3
      %p178 = scmp.ne.s32.totalorder %s173, %s175
      %p179 = scmp.eq.s32.totalorder %s22, 0
      %p180 = por %p178, %p179
      %p181 = scmp.ne.s32.totalorder %s173, %s175
      %p182 = scmp.eq.s32.totalorder %s27, 3
      %p183 = por %p181, %p182
      %p184 = scmp.ne.s32.totalorder %s175, %s176
      %p185 = scmp.eq.s32.totalorder %s27, 0
      %p186 = por %p184, %p185
      %p187 = scmp.ne.s32.totalorder %s175, %s176
      %p188 = scmp.eq.s32.totalorder %s28, 3
      %p189 = por %p187, %p188
      %p191 = scmp.ne.s32.totalorder %s176, %s190
      %p192 = scmp.eq.s32.totalorder %s28, 0
      %p193 = por %p191, %p192
      %s195 = sadd.s32 %s194, 1
      %p198 = scmp.eq.s32.totalorder %s22, 3
      %p199 = scmp.ne.s32.totalorder %s194, %s196
      %p200 = scmp.eq.s32.totalorder %s22, 0
      %p201 = por %p199, %p200
      %p202 = scmp.ne.s32.totalorder %s194, %s196
      %p203 = scmp.eq.s32.totalorder %s27, 3
      %p204 = por %p202, %p203
      %p205 = scmp.ne.s32.totalorder %s196, %s197
      %p206 = scmp.eq.s32.totalorder %s27, 0
      %p207 = por %p205, %p206
      %p208 = scmp.ne.s32.totalorder %s196, %s197
      %p209 = scmp.eq.s32.totalorder %s28, 3
      %p210 = por %p208, %p209
      %p212 = scmp.ne.s32.totalorder %s197, %s211
      %p213 = scmp.eq.s32.totalorder %s28, 0
      %p214 = por %p212, %p213
      %s216 = sadd.s32 %s215, 1
      %p219 = scmp.eq.s32.totalorder %s22, 3
      %p220 = scmp.ne.s32.totalorder %s215, %s217
      %p221 = scmp.eq.s32.totalorder %s22, 0
      %p222 = por %p220, %p221
      %p223 = scmp.ne.s32.totalorder %s215, %s217
      %p224 = scmp.eq.s32.totalorder %s27, 3
      %p225 = por %p223, %p224
      %p226 = scmp.ne.s32.totalorder %s217, %s218
      %p227 = scmp.eq.s32.totalorder %s27, 0
      %p228 = por %p226, %p227
      %p229 = scmp.ne.s32.totalorder %s217, %s218
      %p230 = scmp.eq.s32.totalorder %s28, 3
      %p231 = por %p229, %p230
      %p233 = scmp.ne.s32.totalorder %s218, %s232
      %p234 = scmp.eq.s32.totalorder %s28, 0
      %p235 = por %p233, %p234
      %s237 = sadd.s32 %s236, 1
      %p240 = scmp.eq.s32.totalorder %s22, 3
      %p241 = scmp.ne.s32.totalorder %s236, %s238
      %p242 = scmp.eq.s32.totalorder %s22, 0
      %p243 = por %p241, %p242
      %p244 = scmp.ne.s32.totalorder %s236, %s238
      %p245 = scmp.eq.s32.totalorder %s27, 3
      %p246 = por %p244, %p245
      %p247 = scmp.ne.s32.totalorder %s238, %s239
      %p248 = scmp.eq.s32.totalorder %s27, 0
      %p249 = por %p247, %p248
      %p250 = scmp.ne.s32.totalorder %s238, %s239
      %p251 = scmp.eq.s32.totalorder %s28, 3
      %p252 = por %p250, %p251
      %p254 = scmp.ne.s32.totalorder %s239, %s253
      %p255 = scmp.eq.s32.totalorder %s28, 0
      %p256 = por %p254, %p255
      %s258 = sadd.s32 %s257, 1
      %p261 = scmp.eq.s32.totalorder %s22, 3
      %p262 = scmp.ne.s32.totalorder %s257, %s259
      %p263 = scmp.eq.s32.totalorder %s22, 0
      %p264 = por %p262, %p263
      %p265 = scmp.ne.s32.totalorder %s257, %s259
      %p266 = scmp.eq.s32.totalorder %s27, 3
      %p267 = por %p265, %p266
      %p268 = scmp.ne.s32.totalorder %s259, %s260
      %p269 = scmp.eq.s32.totalorder %s27, 0
      %p270 = por %p268, %p269
      %p271 = scmp.ne.s32.totalorder %s259, %s260
      %p272 = scmp.eq.s32.totalorder %s28, 3
      %p273 = por %p271, %p272
      %p275 = scmp.ne.s32.totalorder %s260, %s274
      %p276 = scmp.eq.s32.totalorder %s28, 0
      %p277 = por %p275, %p276
      %s279 = sadd.s32 %s278, 1
      %p282 = scmp.eq.s32.totalorder %s22, 3
      %p283 = scmp.ne.s32.totalorder %s278, %s280
      %p284 = scmp.eq.s32.totalorder %s22, 0
      %p285 = por %p283, %p284
      %p286 = scmp.ne.s32.totalorder %s278, %s280
      %p287 = scmp.eq.s32.totalorder %s27, 3
      %p288 = por %p286, %p287
      %p289 = scmp.ne.s32.totalorder %s280, %s281
      %p290 = scmp.eq.s32.totalorder %s27, 0
      %p291 = por %p289, %p290
      %p292 = scmp.ne.s32.totalorder %s280, %s281
      %p293 = scmp.eq.s32.totalorder %s28, 3
      %p294 = por %p292, %p293
      %p296 = scmp.ne.s32.totalorder %s281, %s295
      %p297 = scmp.eq.s32.totalorder %s28, 0
      %p298 = por %p296, %p297
      %s300 = sadd.s32 %s299, 1
      %p303 = scmp.eq.s32.totalorder %s22, 3
      %p304 = scmp.ne.s32.totalorder %s299, %s301
      %p305 = scmp.eq.s32.totalorder %s22, 0
      %p306 = por %p304, %p305
      %p307 = scmp.ne.s32.totalorder %s299, %s301
      %p308 = scmp.eq.s32.totalorder %s27, 3
      %p309 = por %p307, %p308
      %p310 = scmp.ne.s32.totalorder %s301, %s302
      %p311 = scmp.eq.s32.totalorder %s27, 0
      %p312 = por %p310, %p311
      %p313 = scmp.ne.s32.totalorder %s301, %s302
      %p314 = scmp.eq.s32.totalorder %s28, 3
      %p315 = por %p313, %p314
      %p317 = scmp.ne.s32.totalorder %s302, %s316
      %p318 = scmp.eq.s32.totalorder %s28, 0
      %p319 = por %p317, %p318
      %s320 = ssub.s32 %s29, %s41
      %s321 = ssub.s32 %s30, %s37
      %s322 = sor.u32 %s320, %s321
      %p323 = scmp.eq.s32.totalorder %s322, 0
      %s325 = sadd.s32 %s324, 1
      %s326 = scalar_select %p323, %s324, %s325
      %p329 = pneg %p323
      %p330 = scmp.eq.s32.totalorder %s22, 3
      %p331 = por %p329, %p330
      %p332 = scmp.ne.s32.totalorder %s324, %s327
      %p333 = scmp.eq.s32.totalorder %s22, 0
      %p334 = por %p332, %p333
      %p335 = scmp.ne.s32.totalorder %s324, %s327
      %p336 = scmp.eq.s32.totalorder %s27, 3
      %p337 = por %p335, %p336
      %p338 = scmp.ne.s32.totalorder %s327, %s328
      %p339 = scmp.eq.s32.totalorder %s27, 0
      %p340 = por %p338, %p339
      %p341 = scmp.ne.s32.totalorder %s327, %s328
      %p342 = scmp.eq.s32.totalorder %s28, 3
      %p343 = por %p341, %p342
      %p345 = scmp.ne.s32.totalorder %s328, %s344
      %p346 = scmp.eq.s32.totalorder %s28, 0
      %p347 = por %p345, %p346
      %p348 = scmp.le.s32.totalorder 1, %s22
      %p349 = scmp.lt.s32.totalorder %s22, 5
      %p350 = pnand %p348, %p349
      %p351 = pneg %p350
      // Predicated region
      $region9: #{tpu_custom_call.1} parent=5 // pred_check
        _
      $region10: #{tpu_custom_call.1} parent=5 // pred_check_branch
        %353 = sbr.rel (%p350) target = $region12
      $region11: #{tpu_custom_call.1} parent=5 // pred_region
        %s354 = ssub.s32 %s22, 1
        // Predicated region
        $region13: #{tpu_custom_call.1} parent=11 // pred_check
          %p355 = pneg %p81
        $region14: #{tpu_custom_call.1} parent=11 // pred_check_branch
          %357 = sbr.rel (%p355) target = $region16
        $region15: #{tpu_custom_call.1} parent=11 // pred_region
          _
        $region16: #{tpu_custom_call.1} parent=11 // pred_fallthru
          _
        // Predicated region
        $region17: #{tpu_custom_call.1} parent=11 // pred_check
          %p358 = pneg %p102
        $region18: #{tpu_custom_call.1} parent=11 // pred_check_branch
          %360 = sbr.rel (%p358) target = $region20
        $region19: #{tpu_custom_call.1} parent=11 // pred_region
          _
        $region20: #{tpu_custom_call.1} parent=11 // pred_fallthru
          _
        // Predicated region
        $region21: #{tpu_custom_call.1} parent=11 // pred_check
          %p361 = pneg %p123
        $region22: #{tpu_custom_call.1} parent=11 // pred_check_branch
          %363 = sbr.rel (%p361) target = $region24
        $region23: #{tpu_custom_call.1} parent=11 // pred_region
          _
        $region24: #{tpu_custom_call.1} parent=11 // pred_fallthru
          _
        // Predicated region
        $region25: #{tpu_custom_call.1} parent=11 // pred_check
          %p364 = pneg %p144
        $region26: #{tpu_custom_call.1} parent=11 // pred_check_branch
          %366 = sbr.rel (%p364) target = $region28
        $region27: #{tpu_custom_call.1} parent=11 // pred_region
          _
        $region28: #{tpu_custom_call.1} parent=11 // pred_fallthru
          _
        // Predicated region
        $region29: #{tpu_custom_call.1} parent=11 // pred_check
          %p367 = pneg %p165
        $region30: #{tpu_custom_call.1} parent=11 // pred_check_branch
          %369 = sbr.rel (%p367) target = $region32
        $region31: #{tpu_custom_call.1} parent=11 // pred_region
          _
        $region32: #{tpu_custom_call.1} parent=11 // pred_fallthru
          _
        // Predicated region
        $region33: #{tpu_custom_call.1} parent=11 // pred_check
          %p370 = pneg %p186
        $region34: #{tpu_custom_call.1} parent=11 // pred_check_branch
          %372 = sbr.rel (%p370) target = $region36
        $region35: #{tpu_custom_call.1} parent=11 // pred_region
          _
        $region36: #{tpu_custom_call.1} parent=11 // pred_fallthru
          _
        // Predicated region
        $region37: #{tpu_custom_call.1} parent=11 // pred_check
          %p373 = pneg %p207
        $region38: #{tpu_custom_call.1} parent=11 // pred_check_branch
          %375 = sbr.rel (%p373) target = $region40
        $region39: #{tpu_custom_call.1} parent=11 // pred_region
          _
        $region40: #{tpu_custom_call.1} parent=11 // pred_fallthru
          _
        // Predicated region
        $region41: #{tpu_custom_call.1} parent=11 // pred_check
          %p376 = pneg %p228
        $region42: #{tpu_custom_call.1} parent=11 // pred_check_branch
          %378 = sbr.rel (%p376) target = $region44
        $region43: #{tpu_custom_call.1} parent=11 // pred_region
          _
        $region44: #{tpu_custom_call.1} parent=11 // pred_fallthru
          _
        // Predicated region
        $region45: #{tpu_custom_call.1} parent=11 // pred_check
          %p379 = pneg %p249
        $region46: #{tpu_custom_call.1} parent=11 // pred_check_branch
          %381 = sbr.rel (%p379) target = $region48
        $region47: #{tpu_custom_call.1} parent=11 // pred_region
          _
        $region48: #{tpu_custom_call.1} parent=11 // pred_fallthru
          _
        // Predicated region
        $region49: #{tpu_custom_call.1} parent=11 // pred_check
          %p382 = pneg %p270
        $region50: #{tpu_custom_call.1} parent=11 // pred_check_branch
          %384 = sbr.rel (%p382) target = $region52
        $region51: #{tpu_custom_call.1} parent=11 // pred_region
          _
        $region52: #{tpu_custom_call.1} parent=11 // pred_fallthru
          _
        // Predicated region
        $region53: #{tpu_custom_call.1} parent=11 // pred_check
          %p385 = pneg %p291
        $region54: #{tpu_custom_call.1} parent=11 // pred_check_branch
          %387 = sbr.rel (%p385) target = $region56
        $region55: #{tpu_custom_call.1} parent=11 // pred_region
          _
        $region56: #{tpu_custom_call.1} parent=11 // pred_fallthru
          _
        // Predicated region
        $region57: #{tpu_custom_call.1} parent=11 // pred_check
          %p388 = pneg %p312
        $region58: #{tpu_custom_call.1} parent=11 // pred_check_branch
          %390 = sbr.rel (%p388) target = $region60
        $region59: #{tpu_custom_call.1} parent=11 // pred_region
          _
        $region60: #{tpu_custom_call.1} parent=11 // pred_fallthru
          _
      $region12: #{tpu_custom_call.1} parent=5 // pred_fallthru
        _
      %p391 = scmp.lt.s32.totalorder %s22, 4
      // Predicated region
      $region61: #{tpu_custom_call.1} parent=5 // pred_check
        %p392 = pneg %p391
      $region62: #{tpu_custom_call.1} parent=5 // pred_check_branch
        %394 = sbr.rel (%p392) target = $region64
      $region63: #{tpu_custom_call.1} parent=5 // pred_region
        // Predicated region
        $region65: #{tpu_custom_call.1} parent=63 // pred_check
          %p395 = pneg %p54
        $region66: #{tpu_custom_call.1} parent=63 // pred_check_branch
          %397 = sbr.rel (%p395) target = $region68
        $region67: #{tpu_custom_call.1} parent=63 // pred_region
          %p398 = scmp.lt.s32.totalorder %s29, 1
          %s399 = scalar_select %p398, %s29, 1
          %s400 = smul.addr %s399, 2
          %s401 = smul.addr %s400, 8
          %s402 = scalar_lea.vmem %s0, %s401
        $region68: #{tpu_custom_call.1} parent=63 // pred_fallthru
          _
      $region64: #{tpu_custom_call.1} parent=5 // pred_fallthru
        _
      %p403 = scmp.le.s32.totalorder 1, %s22
      %p404 = scmp.lt.s32.totalorder %s22, 5
      %p405 = pnand %p403, %p404
      %p406 = pneg %p405
      // Predicated region
      $region69: #{tpu_custom_call.1} parent=5 // pred_check
        _
      $region70: #{tpu_custom_call.1} parent=5 // pred_check_branch
        %408 = sbr.rel (%p405) target = $region72
      $region71: #{tpu_custom_call.1} parent=5 // pred_region
        %s409 = ssub.s32 %s22, 1
        %p410 = scmp.lt.s32.totalorder %s31, 1
        %s411 = scalar_select %p410, %s31, 1
        %s412 = smul.addr %s411, 2
        %s413 = smul.addr %s412, 8
        %s414 = scalar_lea.vmem %s0, %s413
        %p415 = pneg %p60
        %p416 = pneg %p57
        %p417 = pneg %p81
        %p418 = pneg %p78
        %p419 = pneg %p102
        %p420 = pneg %p99
        %p421 = pneg %p123
        %p422 = pneg %p120
        %p423 = pneg %p144
        %p424 = pneg %p141
        %p425 = pneg %p165
        %p426 = pneg %p162
        %p427 = pneg %p186
        %p428 = pneg %p183
        %p429 = pneg %p207
        %p430 = pneg %p204
        %p431 = pneg %p228
        %p432 = pneg %p225
        %p433 = pneg %p249
        %p434 = pneg %p246
        %p435 = pneg %p270
        %p436 = pneg %p267
        %p437 = pneg %p291
        %p438 = pneg %p288
        %p439 = pneg %p312
        %p440 = pneg %p309
        %p441 = pneg %p340
        %p442 = pneg %p337
        %s443 = sand.u32 %s327, 1
        %s444 = scalar_lea.sflag [#allocation6], %s443
        %s445 = sand.u32 %s327, 1
        %s446 = smul.addr %s445, 8
        %s447 = scalar_lea.vmem [#allocation5], %s446
        %p448 = scmp.lt.s32.totalorder %s31, 1
        %s449 = scalar_select %p448, %s31, 1
        %s450 = smul.addr %s449, 2
        %s451 = smul.addr %s450, 8
        %s452 = scalar_lea.vmem %s0, %s451
        %p453 = scmp.eq.s32.totalorder %s32, 0
        // Predicated region
        $region73: #{tpu_custom_call.1} parent=71 // pred_check
          %p454 = pneg %p453
        $region74: #{tpu_custom_call.1} parent=71 // pred_check_branch
          %456 = sbr.rel (%p454) target = $region76
        $region75: #{tpu_custom_call.1} parent=71 // pred_region
          %v457 = vld [vmem:[%s452] sm:$0xff]
          %v458 = vld [vmem:[%s452 + $0x8] sm:$0xff]
          %v459 = vld [vmem:[%s1] sm:$0x1]
          %v460 = vld [vmem:[%s2] sm:$0x1]
          %vm461 = vcmask 261120
          %v462 = vsel %vm461, %v457, 0.0
          %463 = vadd.xlane.f32.xlu0 %v462
          %v464 = vpop.xlane.xlu0 %463
          %v465 = vsel %vm461, %v458, 0.0
          %466 = vadd.xlane.f32.xlu0 %v465
          %v467 = vpop.xlane.xlu0 %466
          %v468 = vrcp.pop 32.0
          %v469 = vmul.f32 %v464, %v468
          %v470 = vmul.f32 %v467, %v468
          %v471 = vsub.f32 %v457, %v469
          %v472 = vsub.f32 %v458, %v470
          %v473 = vmul.f32 %v471, %v471
          %v474 = vmul.f32 %v472, %v472
          %v475 = vsel %vm461, %v473, 0.0
          %476 = vadd.xlane.f32.xlu0 %v475
          %v477 = vpop.xlane.xlu0 %476
          %v478 = vsel %vm461, %v474, 0.0
          %479 = vadd.xlane.f32.xlu0 %v478
          %v480 = vpop.xlane.xlu0 %479
          %v481 = vmul.f32 %v477, %v468
          %v482 = vmul.f32 %v480, %v468
          %v483 = vadd.f32 %v481, 1e-05
          %v484 = vadd.f32 %v482, 1e-05
          %v485 = vrsqrt.pop %v483
          %v486 = vrsqrt.pop %v484
          %v487 = vmul.f32 %v471, %v485
          %v488 = vmul.f32 %v472, %v486
          %v490 = vlaneseq
          %v491 = vshrl.u32 %v490, 7
          %v492 = vsub.s32 0, %v491
          %v493 = vrot.slane %v459, %v492
          %v495 = vmul.f32 %v487, %v493
          %v496 = vmul.f32 %v488, %v493
          %v498 = vlaneseq
          %v499 = vshrl.u32 %v498, 7
          %v500 = vsub.s32 0, %v499
          %v501 = vrot.slane %v460, %v500
          %v503 = vadd.f32 %v495, %v501
          %v504 = vadd.f32 %v496, %v501
          %v505 = vld [vmem:[%s3] sm:$0xff]
          %v506 = vld [vmem:[%s3 + $0x8] sm:$0xff]
          %v507 = vld [vmem:[%s3 + $0x10] sm:$0xff]
          %v508 = vld [vmem:[%s3 + $0x18] sm:$0xff]
          %v509 = vld [vmem:[%s4] sm:$0x1]
          %v511 = vlaneseq
          %v512 = vshrl.u32 %v511, 7
          %v513 = vsub.s32 0, %v512
          %v514 = vrot.slane %v509, %v513
          %v517 = vsel %vm461, %v503, 0
          %v520 = vsel %vm461, %v504, 0
          %522 = vmatprep.subr.mxu0 0.0
          %523 = vmatpush1.msra.mxu0 0.0
          %524 = vmatprep.subr.mxu0 0.0
          %525 = vmatpush1.msra.mxu0 0.0
          %526 = vmatprep.subr.mxu0 0.0
          %527 = vmatpush1.msra.mxu0 0.0
          %528 = vmatprep.subr.mxu0 0.0
          %529 = vmatpush1.msra.mxu0 0.0
          %530 = vmatprep.subr.mxu0 0.0
          %531 = vmatpush1.msra.mxu0 0.0
          %532 = vmatprep.subr.mxu0 0.0
          %533 = vmatpush1.msra.mxu0 0.0
          %534 = vmatprep.subr.mxu0 0.0
          %535 = vmatpush1.msra.mxu0 0.0
          %536 = vmatprep.subr.mxu0 0.0
          %537 = vmatpush1.msra.mxu0 0.0
          %538 = vmatprep.subr.mxu0 0.0
          %539 = vmatpush1.msra.mxu0 0.0
          %540 = vmatprep.subr.mxu0 0.0
          %541 = vmatpush1.msra.mxu0 0.0
          %542 = vmatprep.subr.mxu0 0.0
          %543 = vmatpush1.msra.mxu0 0.0
          %544 = vmatprep.subr.mxu0 0.0
          %545 = vmatpush1.msra.mxu0 0.0
          %546 = vmatprep.subr.mxu0 0.0
          %547 = vmatpush1.msra.mxu0 %v508
          %548 = vmatprep.subr.mxu0 0.0
          %549 = vmatpush1.msra.mxu0 %v507
          %550 = vmatprep.subr.mxu0 0.0
          %551 = vmatpush1.msra.mxu0 %v506
          %552 = vmatprep.subr.mxu0 0.0
          %553 = vmatpush1.msra.mxu0 %v505
          %554 = vmatprep.subr.mxu0 0.0
          %555 = vmatpush2.msra.mxu0 0.0
          %556 = vmatprep.subr.mxu0 0.0
          %557 = vmatpush2.msra.mxu0 0.0
          %558 = vmatprep.subr.mxu0 0.0
          %559 = vmatpush2.msra.mxu0 0.0
          %560 = vmatprep.subr.mxu0 0.0
          %561 = vmatpush2.msra.mxu0 0.0
          %562 = vmatprep.subr.mxu0 0.0
          %563 = vmatpush2.msra.mxu0 0.0
          %564 = vmatprep.subr.mxu0 0.0
          %565 = vmatpush2.msra.mxu0 0.0
          %566 = vmatprep.subr.mxu0 0.0
          %567 = vmatpush2.msra.mxu0 0.0
          %568 = vmatprep.subr.mxu0 0.0
          %569 = vmatpush2.msra.mxu0 0.0
          %570 = vmatprep.subr.mxu0 0.0
          %571 = vmatpush2.msra.mxu0 0.0
          %572 = vmatprep.subr.mxu0 0.0
          %573 = vmatpush2.msra.mxu0 0.0
          %574 = vmatprep.subr.mxu0 0.0
          %575 = vmatpush2.msra.mxu0 0.0
          %576 = vmatprep.subr.mxu0 0.0
          %577 = vmatpush2.msra.mxu0 0.0
          %578 = vmatprep.subr.mxu0 0.0
          %579 = vmatpush2.msra.mxu0 0.0
          %580 = vmatprep.subr.mxu0 0.0
          %581 = vmatpush2.msra.mxu0 0.0
          %582 = vmatprep.subr.mxu0 0.0
          %583 = vmatpush2.msra.mxu0 0.0
          %584 = vmatprep.subr.mxu0 0.0
          %585 = vmatpush2.msra.mxu0 0.0
          %586 = vmatprep.mubr.f32.mxu0 0.0
          %587 = vmatmul.mubr.f32.gmra.mxu0 %v517
          %v588 = vpop.f32.mrf.mxu0
          %v589 = vadd.f32 %v514, %v588
          %v590 = vpop.f32.mrf.mxu0
          %591 = vmatprep.mubr.f32.mxu0 0.0
          %592 = vmatmul.mubr.f32.gmra.mxu0 %v520
          %v593 = vpop.f32.mrf.mxu0
          %v594 = vadd.f32 %v514, %v593
          %v595 = vpop.f32.mrf.mxu0
          %596 = vdwg.mxu0
          %597 = vst.msk [vmem:[#allocation2] sm:$0xff] %vm461, %v589
          %598 = vst.msk [vmem:[#allocation2 + $0x8] sm:$0xff] %vm461, %v594
          %601 = vrot.lane.b32.xlu0 %v589, 96
          %v602 = vpop.permute.xlu0 %601
          %603 = vrot.lane.b32.xlu0 %v594, 96
          %v604 = vpop.permute.xlu0 %603
          %607 = vst.msk [vmem:[#allocation3] sm:$0xff] %vm461, %v602
          %608 = vst.msk [vmem:[#allocation3 + $0x8] sm:$0xff] %vm461, %v604
          %609 = vrot.lane.b32.xlu0 %v589, 64
          %v610 = vpop.permute.xlu0 %609
          %611 = vrot.lane.b32.xlu0 %v594, 64
          %v612 = vpop.permute.xlu0 %611
          %615 = vst.msk [vmem:[#allocation4] sm:$0xff] %vm461, %v610
          %616 = vst.msk [vmem:[#allocation4 + $0x8] sm:$0xff] %vm461, %v612
        $region76: #{tpu_custom_call.1} parent=71 // pred_fallthru
          _
        %s617 = smul.u32 %s32, 8
        %s618 = scalar_lea.vmem %s452, %s617
        %v619 = vld [vmem:[%s618] sm:$0xff]
        %s620 = scalar_lea.vmem [#allocation2], %s617
        %v621 = vld [vmem:[%s620] sm:$0xff]
        %v622 = vld [vmem:[#allocation3] sm:$0xff]
        %v623 = vld [vmem:[#allocation3 + $0x8] sm:$0xff]
        %vm624 = vcmask 261120
        %v626 = vsel %vm624, %v621, 0
        %v629 = vsel %vm624, %v622, 0
        %v632 = vsel %vm624, %v623, 0
        %634 = vmatprep.subr.mxu0 0.0
        %635 = vmatpush1.xpose.msra.mxu0 0.0
        %636 = vmatprep.subr.mxu0 0.0
        %637 = vmatpush1.xpose.msra.mxu0 0.0
        %638 = vmatprep.subr.mxu0 0.0
        %639 = vmatpush1.xpose.msra.mxu0 0.0
        %640 = vmatprep.subr.mxu0 0.0
        %641 = vmatpush1.xpose.msra.mxu0 0.0
        %642 = vmatprep.subr.mxu0 0.0
        %643 = vmatpush1.xpose.msra.mxu0 0.0
        %644 = vmatprep.subr.mxu0 0.0
        %645 = vmatpush1.xpose.msra.mxu0 0.0
        %646 = vmatprep.subr.mxu0 0.0
        %647 = vmatpush1.xpose.msra.mxu0 0.0
        %648 = vmatprep.subr.mxu0 0.0
        %649 = vmatpush1.xpose.msra.mxu0 0.0
        %650 = vmatprep.subr.mxu0 0.0
        %651 = vmatpush1.xpose.msra.mxu0 0.0
        %652 = vmatprep.subr.mxu0 0.0
        %653 = vmatpush1.xpose.msra.mxu0 0.0
        %654 = vmatprep.subr.mxu0 0.0
        %655 = vmatpush1.xpose.msra.mxu0 0.0
        %656 = vmatprep.subr.mxu0 0.0
        %657 = vmatpush1.xpose.msra.mxu0 0.0
        %658 = vmatprep.subr.mxu0 0.0
        %659 = vmatpush1.xpose.msra.mxu0 0.0
        %660 = vmatprep.subr.mxu0 0.0
        %661 = vmatpush1.xpose.msra.mxu0 0.0
        %662 = vmatprep.subr.mxu0 0.0
        %663 = vmatpush1.xpose.msra.mxu0 %v632
        %664 = vmatprep.subr.mxu0 0.0
        %665 = vmatpush1.xpose.msra.mxu0 %v629
        %666 = vmatprep.subr.mxu0 0.0
        %667 = vmatpush2.xpose.msra.mxu0 0.0
        %668 = vmatprep.subr.mxu0 0.0
        %669 = vmatpush2.xpose.msra.mxu0 0.0
        %670 = vmatprep.subr.mxu0 0.0
        %671 = vmatpush2.xpose.msra.mxu0 0.0
        %672 = vmatprep.subr.mxu0 0.0
        %673 = vmatpush2.xpose.msra.mxu0 0.0
        %674 = vmatprep.subr.mxu0 0.0
        %675 = vmatpush2.xpose.msra.mxu0 0.0
        %676 = vmatprep.subr.mxu0 0.0
        %677 = vmatpush2.xpose.msra.mxu0 0.0
        %678 = vmatprep.subr.mxu0 0.0
        %679 = vmatpush2.xpose.msra.mxu0 0.0
        %680 = vmatprep.subr.mxu0 0.0
        %681 = vmatpush2.xpose.msra.mxu0 0.0
        %682 = vmatprep.subr.mxu0 0.0
        %683 = vmatpush2.xpose.msra.mxu0 0.0
        %684 = vmatprep.subr.mxu0 0.0
        %685 = vmatpush2.xpose.msra.mxu0 0.0
        %686 = vmatprep.subr.mxu0 0.0
        %687 = vmatpush2.xpose.msra.mxu0 0.0
        %688 = vmatprep.subr.mxu0 0.0
        %689 = vmatpush2.xpose.msra.mxu0 0.0
        %690 = vmatprep.subr.mxu0 0.0
        %691 = vmatpush2.xpose.msra.mxu0 0.0
        %692 = vmatprep.subr.mxu0 0.0
        %693 = vmatpush2.xpose.msra.mxu0 0.0
        %694 = vmatprep.subr.mxu0 0.0
        %695 = vmatpush2.xpose.msra.mxu0 0.0
        %696 = vmatprep.subr.mxu0 0.0
        %697 = vmatpush2.xpose.msra.mxu0 0.0
        %698 = vmatprep.mubr.f32.mxu0 0.0
        %699 = vmatmul.mubr.f32.gmra.mxu0 %v626
        %v700 = vpop.f32.mrf.mxu0
        %v701 = vadd.f32 0.0, %v700
        %v702 = vpop.f32.mrf.mxu0
        %703 = vdwg.mxu0
        %v704 = vlaneseq
        %v705 = vshrl.u32 %v704, 7
        %v706 = vstv %s617
        %v707 = vadd.s32 %v705, %v706
        %v708 = vlaneseq
        %v709 = vand.u32 %v708, 127
        %vm710 = vcmp.ge.s32.totalorder %v707, %v709
        %v711 = vsel %vm710, %v701, -1e+30
        %vm712 = vcmask 130048
        %v713 = vsel %vm712, %v711, -inf
        %714 = vmax.xlane.f32.xlu0 %v713
        %v715 = vpop.xlane.xlu0 %714
        %v716 = vsub.f32 %v711, %v715
        %v717 = vmul.f32 %v716, 1.442695
        %v718 = vpow.pop %v717
        %v719 = vsel %vm712, %v718, 0.0
        %720 = vadd.xlane.f32.xlu0 %v719
        %v721 = vpop.xlane.xlu0 %720
        %v722 = vld [vmem:[#allocation4] sm:$0xff]
        %v723 = vld [vmem:[#allocation4 + $0x8] sm:$0xff]
        %v725 = vsel %vm712, %v718, 0
        %727 = vmatprep.subr.mxu0 0.0
        %728 = vmatpush1.msra.mxu0 0.0
        %729 = vmatprep.subr.mxu0 0.0
        %730 = vmatpush1.msra.mxu0 0.0
        %731 = vmatprep.subr.mxu0 0.0
        %732 = vmatpush1.msra.mxu0 0.0
        %733 = vmatprep.subr.mxu0 0.0
        %734 = vmatpush1.msra.mxu0 0.0
        %735 = vmatprep.subr.mxu0 0.0
        %736 = vmatpush1.msra.mxu0 0.0
        %737 = vmatprep.subr.mxu0 0.0
        %738 = vmatpush1.msra.mxu0 0.0
        %739 = vmatprep.subr.mxu0 0.0
        %740 = vmatpush1.msra.mxu0 0.0
        %741 = vmatprep.subr.mxu0 0.0
        %742 = vmatpush1.msra.mxu0 0.0
        %743 = vmatprep.subr.mxu0 0.0
        %744 = vmatpush1.msra.mxu0 0.0
        %745 = vmatprep.subr.mxu0 0.0
        %746 = vmatpush1.msra.mxu0 0.0
        %747 = vmatprep.subr.mxu0 0.0
        %748 = vmatpush1.msra.mxu0 0.0
        %749 = vmatprep.subr.mxu0 0.0
        %750 = vmatpush1.msra.mxu0 0.0
        %751 = vmatprep.subr.mxu0 0.0
        %752 = vmatpush1.msra.mxu0 0.0
        %753 = vmatprep.subr.mxu0 0.0
        %754 = vmatpush1.msra.mxu0 0.0
        %755 = vmatprep.subr.mxu0 0.0
        %756 = vmatpush1.msra.mxu0 %v723
        %757 = vmatprep.subr.mxu0 0.0
        %758 = vmatpush1.msra.mxu0 %v722
        %759 = vmatprep.subr.mxu0 0.0
        %760 = vmatpush2.msra.mxu0 0.0
        %761 = vmatprep.subr.mxu0 0.0
        %762 = vmatpush2.msra.mxu0 0.0
        %763 = vmatprep.subr.mxu0 0.0
        %764 = vmatpush2.msra.mxu0 0.0
        %765 = vmatprep.subr.mxu0 0.0
        %766 = vmatpush2.msra.mxu0 0.0
        %767 = vmatprep.subr.mxu0 0.0
        %768 = vmatpush2.msra.mxu0 0.0
        %769 = vmatprep.subr.mxu0 0.0
        %770 = vmatpush2.msra.mxu0 0.0
        %771 = vmatprep.subr.mxu0 0.0
        %772 = vmatpush2.msra.mxu0 0.0
        %773 = vmatprep.subr.mxu0 0.0
        %774 = vmatpush2.msra.mxu0 0.0
        %775 = vmatprep.subr.mxu0 0.0
        %776 = vmatpush2.msra.mxu0 0.0
        %777 = vmatprep.subr.mxu0 0.0
        %778 = vmatpush2.msra.mxu0 0.0
        %779 = vmatprep.subr.mxu0 0.0
        %780 = vmatpush2.msra.mxu0 0.0
        %781 = vmatprep.subr.mxu0 0.0
        %782 = vmatpush2.msra.mxu0 0.0
        %783 = vmatprep.subr.mxu0 0.0
        %784 = vmatpush2.msra.mxu0 0.0
        %785 = vmatprep.subr.mxu0 0.0
        %786 = vmatpush2.msra.mxu0 0.0
        %787 = vmatprep.subr.mxu0 0.0
        %788 = vmatpush2.msra.mxu0 0.0
        %789 = vmatprep.subr.mxu0 0.0
        %790 = vmatpush2.msra.mxu0 0.0
        %791 = vmatprep.mubr.f32.mxu0 0.0
        %792 = vmatmul.mubr.f32.gmra.mxu0 %v725
        %v793 = vpop.f32.mrf.mxu0
        %v794 = vadd.f32 0.0, %v793
        %v795 = vpop.f32.mrf.mxu0
        %796 = vdwg.mxu0
        %v797 = vrcp.pop %v721
        %v798 = vmul.f32 %v794, %v797
        %v799 = vld [vmem:[%s5] sm:$0xff]
        %v800 = vld [vmem:[%s5 + $0x8] sm:$0xff]
        %v801 = vld [vmem:[%s5 + $0x10] sm:$0xff]
        %v802 = vld [vmem:[%s5 + $0x18] sm:$0xff]
        %v803 = vld [vmem:[%s6] sm:$0x1]
        %v805 = vlaneseq
        %v806 = vshrl.u32 %v805, 7
        %v807 = vsub.s32 0, %v806
        %v808 = vrot.slane %v803, %v807
        %v811 = vsel %vm624, %v798, 0
        %813 = vmatprep.subr.mxu0 0.0
        %814 = vmatpush1.msra.mxu0 0.0
        %815 = vmatprep.subr.mxu0 0.0
        %816 = vmatpush1.msra.mxu0 0.0
        %817 = vmatprep.subr.mxu0 0.0
        %818 = vmatpush1.msra.mxu0 0.0
        %819 = vmatprep.subr.mxu0 0.0
        %820 = vmatpush1.msra.mxu0 0.0
        %821 = vmatprep.subr.mxu0 0.0
        %822 = vmatpush1.msra.mxu0 0.0
        %823 = vmatprep.subr.mxu0 0.0
        %824 = vmatpush1.msra.mxu0 0.0
        %825 = vmatprep.subr.mxu0 0.0
        %826 = vmatpush1.msra.mxu0 0.0
        %827 = vmatprep.subr.mxu0 0.0
        %828 = vmatpush1.msra.mxu0 0.0
        %829 = vmatprep.subr.mxu0 0.0
        %830 = vmatpush1.msra.mxu0 0.0
        %831 = vmatprep.subr.mxu0 0.0
        %832 = vmatpush1.msra.mxu0 0.0
        %833 = vmatprep.subr.mxu0 0.0
        %834 = vmatpush1.msra.mxu0 0.0
        %835 = vmatprep.subr.mxu0 0.0
        %836 = vmatpush1.msra.mxu0 0.0
        %837 = vmatprep.subr.mxu0 0.0
        %838 = vmatpush1.msra.mxu0 %v802
        %839 = vmatprep.subr.mxu0 0.0
        %840 = vmatpush1.msra.mxu0 %v801
        %841 = vmatprep.subr.mxu0 0.0
        %842 = vmatpush1.msra.mxu0 %v800
        %843 = vmatprep.subr.mxu0 0.0
        %844 = vmatpush1.msra.mxu0 %v799
        %845 = vmatprep.subr.mxu0 0.0
        %846 = vmatpush2.msra.mxu0 0.0
        %847 = vmatprep.subr.mxu0 0.0
        %848 = vmatpush2.msra.mxu0 0.0
        %849 = vmatprep.subr.mxu0 0.0
        %850 = vmatpush2.msra.mxu0 0.0
        %851 = vmatprep.subr.mxu0 0.0
        %852 = vmatpush2.msra.mxu0 0.0
        %853 = vmatprep.subr.mxu0 0.0
        %854 = vmatpush2.msra.mxu0 0.0
        %855 = vmatprep.subr.mxu0 0.0
        %856 = vmatpush2.msra.mxu0 0.0
        %857 = vmatprep.subr.mxu0 0.0
        %858 = vmatpush2.msra.mxu0 0.0
        %859 = vmatprep.subr.mxu0 0.0
        %860 = vmatpush2.msra.mxu0 0.0
        %861 = vmatprep.subr.mxu0 0.0
        %862 = vmatpush2.msra.mxu0 0.0
        %863 = vmatprep.subr.mxu0 0.0
        %864 = vmatpush2.msra.mxu0 0.0
        %865 = vmatprep.subr.mxu0 0.0
        %866 = vmatpush2.msra.mxu0 0.0
        %867 = vmatprep.subr.mxu0 0.0
        %868 = vmatpush2.msra.mxu0 0.0
        %869 = vmatprep.subr.mxu0 0.0
        %870 = vmatpush2.msra.mxu0 0.0
        %871 = vmatprep.subr.mxu0 0.0
        %872 = vmatpush2.msra.mxu0 0.0
        %873 = vmatprep.subr.mxu0 0.0
        %874 = vmatpush2.msra.mxu0 0.0
        %875 = vmatprep.subr.mxu0 0.0
        %876 = vmatpush2.msra.mxu0 0.0
        %877 = vmatprep.mubr.f32.mxu0 0.0
        %878 = vmatmul.mubr.f32.gmra.mxu0 %v811
        %v879 = vpop.f32.mrf.mxu0
        %v880 = vadd.f32 %v808, %v879
        %v881 = vpop.f32.mrf.mxu0
        %882 = vdwg.mxu0
        %v883 = vadd.f32 %v619, %v880
        %v884 = vld [vmem:[%s7] sm:$0x1]
        %v885 = vld [vmem:[%s8] sm:$0x1]
        %v886 = vsel %vm624, %v883, 0.0
        %887 = vadd.xlane.f32.xlu0 %v886
        %v888 = vpop.xlane.xlu0 %887
        %v889 = vrcp.pop 32.0
        %v890 = vmul.f32 %v888, %v889
        %v891 = vsub.f32 %v883, %v890
        %v892 = vmul.f32 %v891, %v891
        %v893 = vsel %vm624, %v892, 0.0
        %894 = vadd.xlane.f32.xlu0 %v893
        %v895 = vpop.xlane.xlu0 %894
        %v896 = vmul.f32 %v895, %v889
        %v897 = vadd.f32 %v896, 1e-05
        %v898 = vrsqrt.pop %v897
        %v899 = vmul.f32 %v891, %v898
        %v901 = vlaneseq
        %v902 = vshrl.u32 %v901, 7
        %v903 = vsub.s32 0, %v902
        %v904 = vrot.slane %v884, %v903
        %v906 = vmul.f32 %v899, %v904
        %v908 = vlaneseq
        %v909 = vshrl.u32 %v908, 7
        %v910 = vsub.s32 0, %v909
        %v911 = vrot.slane %v885, %v910
        %v913 = vadd.f32 %v906, %v911
        %v914 = vld [vmem:[%s9] sm:$0xff]
        %v915 = vld [vmem:[%s9 + $0x8] sm:$0xff]
        %v916 = vld [vmem:[%s9 + $0x10] sm:$0xff]
        %v917 = vld [vmem:[%s9 + $0x18] sm:$0xff]
        %v918 = vld [vmem:[%s10] sm:$0x1]
        %v920 = vlaneseq
        %v921 = vshrl.u32 %v920, 7
        %v922 = vsub.s32 0, %v921
        %v923 = vrot.slane %v918, %v922
        %v926 = vsel %vm624, %v913, 0
        %928 = vmatprep.subr.mxu0 0.0
        %929 = vmatpush1.msra.mxu0 0.0
        %930 = vmatprep.subr.mxu0 0.0
        %931 = vmatpush1.msra.mxu0 0.0
        %932 = vmatprep.subr.mxu0 0.0
        %933 = vmatpush1.msra.mxu0 0.0
        %934 = vmatprep.subr.mxu0 0.0
        %935 = vmatpush1.msra.mxu0 0.0
        %936 = vmatprep.subr.mxu0 0.0
        %937 = vmatpush1.msra.mxu0 0.0
        %938 = vmatprep.subr.mxu0 0.0
        %939 = vmatpush1.msra.mxu0 0.0
        %940 = vmatprep.subr.mxu0 0.0
        %941 = vmatpush1.msra.mxu0 0.0
        %942 = vmatprep.subr.mxu0 0.0
        %943 = vmatpush1.msra.mxu0 0.0
        %944 = vmatprep.subr.mxu0 0.0
        %945 = vmatpush1.msra.mxu0 0.0
        %946 = vmatprep.subr.mxu0 0.0
        %947 = vmatpush1.msra.mxu0 0.0
        %948 = vmatprep.subr.mxu0 0.0
        %949 = vmatpush1.msra.mxu0 0.0
        %950 = vmatprep.subr.mxu0 0.0
        %951 = vmatpush1.msra.mxu0 0.0
        %952 = vmatprep.subr.mxu0 0.0
        %953 = vmatpush1.msra.mxu0 %v917
        %954 = vmatprep.subr.mxu0 0.0
        %955 = vmatpush1.msra.mxu0 %v916
        %956 = vmatprep.subr.mxu0 0.0
        %957 = vmatpush1.msra.mxu0 %v915
        %958 = vmatprep.subr.mxu0 0.0
        %959 = vmatpush1.msra.mxu0 %v914
        %960 = vmatprep.subr.mxu0 0.0
        %961 = vmatpush2.msra.mxu0 0.0
        %962 = vmatprep.subr.mxu0 0.0
        %963 = vmatpush2.msra.mxu0 0.0
        %964 = vmatprep.subr.mxu0 0.0
        %965 = vmatpush2.msra.mxu0 0.0
        %966 = vmatprep.subr.mxu0 0.0
        %967 = vmatpush2.msra.mxu0 0.0
        %968 = vmatprep.subr.mxu0 0.0
        %969 = vmatpush2.msra.mxu0 0.0
        %970 = vmatprep.subr.mxu0 0.0
        %971 = vmatpush2.msra.mxu0 0.0
        %972 = vmatprep.subr.mxu0 0.0
        %973 = vmatpush2.msra.mxu0 0.0
        %974 = vmatprep.subr.mxu0 0.0
        %975 = vmatpush2.msra.mxu0 0.0
        %976 = vmatprep.subr.mxu0 0.0
        %977 = vmatpush2.msra.mxu0 0.0
        %978 = vmatprep.subr.mxu0 0.0
        %979 = vmatpush2.msra.mxu0 0.0
        %980 = vmatprep.subr.mxu0 0.0
        %981 = vmatpush2.msra.mxu0 0.0
        %982 = vmatprep.subr.mxu0 0.0
        %983 = vmatpush2.msra.mxu0 0.0
        %984 = vmatprep.subr.mxu0 0.0
        %985 = vmatpush2.msra.mxu0 0.0
        %986 = vmatprep.subr.mxu0 0.0
        %987 = vmatpush2.msra.mxu0 0.0
        %988 = vmatprep.subr.mxu0 0.0
        %989 = vmatpush2.msra.mxu0 0.0
        %990 = vmatprep.subr.mxu0 0.0
        %991 = vmatpush2.msra.mxu0 0.0
        %992 = vmatprep.mubr.f32.mxu0 0.0
        %993 = vmatmul.mubr.f32.gmra.mxu0 %v926
        %v994 = vpop.f32.mrf.mxu0
        %v995 = vadd.f32 %v923, %v994
        %v996 = vpop.f32.mrf.mxu0
        %997 = vdwg.mxu0
        %v998 = vmul.f32 %v995, 0.5
        %v999 = vmul.f32 %v995, 0.044715
        %v1000 = vmul.f32 %v999, %v995
        %v1001 = vmul.f32 %v1000, %v995
        %v1002 = vadd.f32 %v995, %v1001
        %v1003 = vmul.f32 %v1002, 0.7978846
        %v1004 = vtanh.pop %v1003
        %v1005 = vadd.f32 %v1004, 1.0
        %v1006 = vmul.f32 %v998, %v1005
        %v1007 = vld [vmem:[%s11] sm:$0xff]
        %v1008 = vld [vmem:[%s11 + $0x8] sm:$0xff]
        %v1009 = vld [vmem:[%s11 + $0x10] sm:$0xff]
        %v1010 = vld [vmem:[%s11 + $0x18] sm:$0xff]
        %v1011 = vld [vmem:[%s11 + $0x20] sm:$0xff]
        %v1012 = vld [vmem:[%s11 + $0x28] sm:$0xff]
        %v1013 = vld [vmem:[%s11 + $0x30] sm:$0xff]
        %v1014 = vld [vmem:[%s11 + $0x38] sm:$0xff]
        %v1015 = vld [vmem:[%s11 + $0x40] sm:$0xff]
        %v1016 = vld [vmem:[%s11 + $0x48] sm:$0xff]
        %v1017 = vld [vmem:[%s11 + $0x50] sm:$0xff]
        %v1018 = vld [vmem:[%s11 + $0x58] sm:$0xff]
        %v1019 = vld [vmem:[%s11 + $0x60] sm:$0xff]
        %v1020 = vld [vmem:[%s11 + $0x68] sm:$0xff]
        %v1021 = vld [vmem:[%s11 + $0x70] sm:$0xff]
        %v1022 = vld [vmem:[%s11 + $0x78] sm:$0xff]
        %v1023 = vld [vmem:[%s12] sm:$0x1]
        %v1025 = vlaneseq
        %v1026 = vshrl.u32 %v1025, 7
        %v1027 = vsub.s32 0, %v1026
        %v1028 = vrot.slane %v1023, %v1027
        %1030 = vmatprep.subr.mxu0 0.0
        %1031 = vmatpush1.msra.mxu0 %v1022
        %1032 = vmatprep.subr.mxu0 0.0
        %1033 = vmatpush1.msra.mxu0 %v1021
        %1034 = vmatprep.subr.mxu0 0.0
        %1035 = vmatpush1.msra.mxu0 %v1020
        %1036 = vmatprep.subr.mxu0 0.0
        %1037 = vmatpush1.msra.mxu0 %v1019
        %1038 = vmatprep.subr.mxu0 0.0
        %1039 = vmatpush1.msra.mxu0 %v1018
        %1040 = vmatprep.subr.mxu0 0.0
        %1041 = vmatpush1.msra.mxu0 %v1017
        %1042 = vmatprep.subr.mxu0 0.0
        %1043 = vmatpush1.msra.mxu0 %v1016
        %1044 = vmatprep.subr.mxu0 0.0
        %1045 = vmatpush1.msra.mxu0 %v1015
        %1046 = vmatprep.subr.mxu0 0.0
        %1047 = vmatpush1.msra.mxu0 %v1014
        %1048 = vmatprep.subr.mxu0 0.0
        %1049 = vmatpush1.msra.mxu0 %v1013
        %1050 = vmatprep.subr.mxu0 0.0
        %1051 = vmatpush1.msra.mxu0 %v1012
        %1052 = vmatprep.subr.mxu0 0.0
        %1053 = vmatpush1.msra.mxu0 %v1011
        %1054 = vmatprep.subr.mxu0 0.0
        %1055 = vmatpush1.msra.mxu0 %v1010
        %1056 = vmatprep.subr.mxu0 0.0
        %1057 = vmatpush1.msra.mxu0 %v1009
        %1058 = vmatprep.subr.mxu0 0.0
        %1059 = vmatpush1.msra.mxu0 %v1008
        %1060 = vmatprep.subr.mxu0 0.0
        %1061 = vmatpush1.msra.mxu0 %v1007
        %1062 = vmatprep.subr.mxu0 0.0
        %1063 = vmatpush2.msra.mxu0 0.0
        %1064 = vmatprep.subr.mxu0 0.0
        %1065 = vmatpush2.msra.mxu0 0.0
        %1066 = vmatprep.subr.mxu0 0.0
        %1067 = vmatpush2.msra.mxu0 0.0
        %1068 = vmatprep.subr.mxu0 0.0
        %1069 = vmatpush2.msra.mxu0 0.0
        %1070 = vmatprep.subr.mxu0 0.0
        %1071 = vmatpush2.msra.mxu0 0.0
        %1072 = vmatprep.subr.mxu0 0.0
        %1073 = vmatpush2.msra.mxu0 0.0
        %1074 = vmatprep.subr.mxu0 0.0
        %1075 = vmatpush2.msra.mxu0 0.0
        %1076 = vmatprep.subr.mxu0 0.0
        %1077 = vmatpush2.msra.mxu0 0.0
        %1078 = vmatprep.subr.mxu0 0.0
        %1079 = vmatpush2.msra.mxu0 0.0
        %1080 = vmatprep.subr.mxu0 0.0
        %1081 = vmatpush2.msra.mxu0 0.0
        %1082 = vmatprep.subr.mxu0 0.0
        %1083 = vmatpush2.msra.mxu0 0.0
        %1084 = vmatprep.subr.mxu0 0.0
        %1085 = vmatpush2.msra.mxu0 0.0
        %1086 = vmatprep.subr.mxu0 0.0
        %1087 = vmatpush2.msra.mxu0 0.0
        %1088 = vmatprep.subr.mxu0 0.0
        %1089 = vmatpush2.msra.mxu0 0.0
        %1090 = vmatprep.subr.mxu0 0.0
        %1091 = vmatpush2.msra.mxu0 0.0
        %1092 = vmatprep.subr.mxu0 0.0
        %1093 = vmatpush2.msra.mxu0 0.0
        %1094 = vmatprep.mubr.f32.mxu0 0.0
        %1095 = vmatmul.mubr.f32.gmra.mxu0 %v1006
        %v1096 = vpop.f32.mrf.mxu0
        %v1097 = vadd.f32 %v1028, %v1096
        %v1098 = vpop.f32.mrf.mxu0
        %1099 = vdwg.mxu0
        %v1100 = vadd.f32 %v883, %v1097
        %1101 = vst.msk [vmem:[%s447] sm:$0xff] %vm624, %v1100
        %s1102 = sand.u32 %s327, 1
        %s1103 = scalar_lea.sflag [#allocation6], %s1102
        %s1104 = sand.u32 %s327, 1
        %s1105 = smul.addr %s1104, 8
        %s1106 = scalar_lea.vmem [#allocation5], %s1105
        // Predicated region
        $region77: #{tpu_custom_call.1} parent=71 // pred_check
          %p1107 = pneg %p337
        $region78: #{tpu_custom_call.1} parent=71 // pred_check_branch
          %1109 = sbr.rel (%p1107) target = $region80
        $region79: #{tpu_custom_call.1} parent=71 // pred_region
          %s1111 = ssub.s32 128, 128
          %1112 = vsyncadd %s1103, %s1111
          %s1113 = smul.addr %s31, 2
          %s1114 = sadd.s32 %s32, %s1113
          %s1115 = smul.addr %s1114, 128
          %s1116 = scalar_lea.hbm %s13, %s1115
          %s1118 = sshll.u32 %s1106, 4
          %s1119 = int_to_ptr.vmem [resolvable:$true] %s1118
          %1121 = dma.vmem_to_hbm [thread:$0]  %s1119, 128, %s1116, %s1103
        $region80: #{tpu_custom_call.1} parent=71 // pred_fallthru
          _
      $region72: #{tpu_custom_call.1} parent=5 // pred_fallthru
        _
      %p1122 = scmp.le.s32.totalorder 2, %s22
      // Predicated region
      $region81: #{tpu_custom_call.1} parent=5 // pred_check
        %p1123 = pneg %p1122
      $region82: #{tpu_custom_call.1} parent=5 // pred_check_branch
        %1125 = sbr.rel (%p1123) target = $region84
      $region83: #{tpu_custom_call.1} parent=5 // pred_region
        %s1126 = ssub.s32 %s22, 2
        // Predicated region
        $region85: #{tpu_custom_call.1} parent=83 // pred_check
          %p1127 = pneg %p343
        $region86: #{tpu_custom_call.1} parent=83 // pred_check_branch
          %1129 = sbr.rel (%p1127) target = $region88
        $region87: #{tpu_custom_call.1} parent=83 // pred_region
          %s1130 = sand.u32 %s328, 1
          %s1131 = scalar_lea.sflag [#allocation6], %s1130
          %s1132 = sand.u32 %s328, 1
          %s1133 = smul.addr %s1132, 8
          %s1134 = scalar_lea.vmem [#allocation5], %s1133
          %1135 = dma.done %s1131, 128
        $region88: #{tpu_custom_call.1} parent=83 // pred_fallthru
          _
      $region84: #{tpu_custom_call.1} parent=5 // pred_fallthru
        _
    $region6: #{tpu_custom_call.1} parent=1 // loop_footer
      %s26 = sadd.s32 1, %s22
    $region7: #{tpu_custom_call.1} parent=1 // loop_footer_branch
      %21 = sbr.rel target = $region3
    $region8: #{tpu_custom_call.1} parent=1 // loop_exit
      _
    %1136 = vsyncpa [#allocation6], 1
    %s1137 = scalar_lea.sflag [#allocation6], 1
    %1138 = vsyncpa %s1137, 1

</llo_original>
